<compile_context>
chip_gen: v6e
topology: v6e:2x2x1
jax: 0.10.0
libtpu: 0.0.40
codegen_flags: <defaults>
</compile_context>

<pallas_src>
import jax
import jax.numpy as jnp
from jax import lax
from jax.experimental import pallas as pl
from jax.experimental.pallas import tpu as pltpu


def _pointnet_pool_kernel(ef_ref, mask_ref, batch_ref,
                          w1_ref, b1_ref, w2_ref, b2_ref, w3_ref, b3_ref,
                          part_ref, pooled_acc):
    """One node tile: local_nn per slot -> K-max -> global_nn -> per-graph max."""
    i = pl.program_id(1)

    @pl.when(i == 0)
    def _init():
        pooled_acc[...] = jnp.zeros_like(pooled_acc)

    k, _, tn = ef_ref.shape                       # (K, F, node_tile), static
    hidden = w2_ref.shape[0]
    num_graphs = pooled_acc.shape[0]

    w1t = w1_ref[...]                             # (H, F)  bf16 (stored)
    w2t = w2_ref[...]                             # (H, H)  bf16
    w3t = w3_ref[...]                             # (H, H)  bf16
    b1 = b1_ref[...]                              # (H, 1)  f32
    b2 = b2_ref[...]
    b3 = b3_ref[...]

    # ---- local_nn per neighbour slot + running max over slots (transposed) ----
    node = jnp.zeros((hidden, tn), jnp.float32)
    for s in range(k):                            # K is small & static -> unroll
        h = jnp.dot(w1t, ef_ref[s], preferred_element_type=jnp.float32) + b1
        h = jnp.maximum(h, 0.0)
        h = jnp.dot(w2t, h.astype(jnp.bfloat16),
                    preferred_element_type=jnp.float32) + b2
        h = jnp.maximum(h, 0.0)                   # (H, tn), >= 0 (ReLU)
        # invalid slots -> 0; messages are >= 0 so max(valid msgs, 0) equals the
        # max over valid slots, and degree-0 nodes correctly resolve to 0.
        node = jnp.maximum(node, h * mask_ref[pl.ds(s, 1), :])

    # ---- global_nn ------------------------------------------------------------
    node = jnp.dot(w3t, node.astype(jnp.bfloat16),
                   preferred_element_type=jnp.float32) + b3
    node = jnp.maximum(node, 0.0)                 # (H, tn), >= 0

    # ---- per-graph running max: graphs outermost, dense lane reduce -----------
    gids = batch_ref[...]                         # (1, tn) int32, padded = -1
    giota = lax.broadcasted_iota(jnp.int32, (num_graphs, 1, tn), 0)
    contrib = jnp.where(giota == gids[None], node[None], 0.0)   # (B, H, tn)
    pooled_acc[...] = jnp.maximum(pooled_acc[...], jnp.max(contrib, axis=-1))

    # ---- emit this core-split's partial pooled features -----------------------
    @pl.when(i == pl.num_programs(1) - 1)
    def _finish():
        part_ref[...] = pooled_acc[...]


def _build_neighbor_table(edge_index, num_nodes, max_degree=None):
    """Regularise edge_index (2, E) into a fixed-degree (N, K) source table."""
    src = edge_index[0].astype(jnp.int32)
    dst = edge_index[1].astype(jnp.int32)
    num_edges = src.shape[0]
    deg = jnp.zeros((num_nodes,), jnp.int32).at[dst].add(1)
    if max_degree is None:
        # Data-dependent; runs eagerly.  Pass max_degree explicitly under jit.
        max_degree = max(int(jax.device_get(jnp.max(deg))), 1)
    elif not isinstance(deg, jax.core.Tracer):
        actual = int(jax.device_get(jnp.max(deg)))
        if actual > max_degree:
            raise ValueError(
                f"max_degree={max_degree} < actual max in-degree {actual}: "
                "edges would be silently dropped")
    order = jnp.argsort(dst)                       # group edges by destination
    sdst = dst[order]
    ssrc = src[order]
    seg_start = jnp.cumsum(deg) - deg              # exclusive prefix of in-degree
    slot = jnp.arange(num_edges, dtype=jnp.int32) - seg_start[sdst]
    nbr = jnp.full((num_nodes, max_degree), -1, jnp.int32)
    nbr = nbr.at[sdst, slot].set(ssrc)
    return nbr, max_degree


def init_params(key, in_feats, pos_dim, hidden, num_classes):
    ks = jax.random.split(key, 4)
    fe = in_feats + pos_dim

    def lin(k, fan_in, fan_out):
        return (jax.random.normal(k, (fan_in, fan_out), jnp.float32)
                / jnp.sqrt(jnp.float32(fan_in)))

    return {
        "w1": lin(ks[0], fe, hidden),      "b1": jnp.zeros((1, hidden), jnp.float32),
        "w2": lin(ks[1], hidden, hidden),  "b2": jnp.zeros((1, hidden), jnp.float32),
        "w3": lin(ks[2], hidden, hidden),  "b3": jnp.zeros((1, hidden), jnp.float32),
        "wout": lin(ks[3], hidden, num_classes),
        "bout": jnp.zeros((1, num_classes), jnp.float32),
    }


def loc_only_net_explain(x, edge_index, batch, pos, params, num_graphs,
                         logits=True, node_tile=512, max_degree=None,
                         core_splits=2):
    """Mirrors LocOnlyNetExplain.forward(x, edge_index, batch, pos, logits)."""
    num_nodes, f_in = x.shape
    pos_dim = pos.shape[1]
    hidden = params["w1"].shape[1]
    feat = f_in + pos_dim
    assert params["w1"].shape[0] == feat

    # --- glue (plain JAX): neighbour table + per-edge feature gather ----------
    nbr, k = _build_neighbor_table(edge_index, num_nodes, max_degree)
    valid = nbr >= 0                                        # (N, K)
    nbr_safe = jnp.where(valid, nbr, 0)
    x_j = x[nbr_safe]                                       # (N, K, Fin)
    rel = pos[nbr_safe] - pos[:, None, :]                   # (N, K, D) = pos_j - pos_i
    edge_feat = jnp.concatenate([x_j, rel], axis=-1)        # (N, K, F) f32

    # Transposed, bf16 layout: node axis is the 128-lane-dense last dim.
    ef_t = jnp.transpose(edge_feat, (1, 2, 0)).astype(jnp.bfloat16)   # (K, F, N)
    mask_t = jnp.transpose(valid.astype(jnp.float32), (1, 0))         # (K, N)
    batch_row = batch.astype(jnp.int32)[None, :]                      # (1, N)

    # --- tiling: lane-dim node tile, split across cores (megacore on v7x) -----
    core_splits = max(1, int(core_splits))
    node_tile = max(128, (int(node_tile) // 128) * 128)
    per_split = pl.cdiv(num_nodes, core_splits)
    node_tile = min(node_tile, max(128, pl.cdiv(per_split, 128) * 128))
    chunk = node_tile * core_splits
    n_pad = pl.cdiv(num_nodes, chunk) * chunk
    tiles_per_split = n_pad // chunk
    pad = n_pad - num_nodes
    if pad:
        ef_t = jnp.pad(ef_t, ((0, 0), (0, 0), (0, pad)))
        mask_t = jnp.pad(mask_t, ((0, 0), (0, pad)))
        batch_row = jnp.pad(batch_row, ((0, 0), (0, pad)), constant_values=-1)

    # --- weights: pre-transposed + bf16 once (resident, no per-tile casts) ----
    w1t = params["w1"].T.astype(jnp.bfloat16)               # (H, F)
    w2t = params["w2"].T.astype(jnp.bfloat16)               # (H, H)
    w3t = params["w3"].T.astype(jnp.bfloat16)               # (H, H)
    b1c = params["b1"].T.astype(jnp.float32)                # (H, 1)
    b2c = params["b2"].T.astype(jnp.float32)
    b3c = params["b3"].T.astype(jnp.float32)

    node_idx = lambda c, i: (0, c * tiles_per_split + i)

    partials = pl.pallas_call(
        _pointnet_pool_kernel,
        out_shape=jax.ShapeDtypeStruct((core_splits, num_graphs, hidden),
                                       jnp.float32),
        grid_spec=pltpu.PrefetchScalarGridSpec(
            num_scalar_prefetch=0,
            grid=(core_splits, tiles_per_split),
            in_specs=[
                pl.BlockSpec((k, feat, node_tile),
                             lambda c, i: (0, 0, c * tiles_per_split + i)),
                pl.BlockSpec((k, node_tile), node_idx),
                pl.BlockSpec((1, node_tile), node_idx),
                pl.BlockSpec((hidden, feat), lambda c, i: (0, 0)),
                pl.BlockSpec((hidden, 1), lambda c, i: (0, 0)),
                pl.BlockSpec((hidden, hidden), lambda c, i: (0, 0)),
                pl.BlockSpec((hidden, 1), lambda c, i: (0, 0)),
                pl.BlockSpec((hidden, hidden), lambda c, i: (0, 0)),
                pl.BlockSpec((hidden, 1), lambda c, i: (0, 0)),
            ],
            out_specs=pl.BlockSpec((None, num_graphs, hidden),
                                   lambda c, i: (c, 0, 0)),
            scratch_shapes=[pltpu.VMEM((num_graphs, hidden), jnp.float32)],
        ),
        compiler_params=pltpu.CompilerParams(
            dimension_semantics=("parallel", "arbitrary"),
            vmem_limit_bytes=32 * 1024 * 1024,
        ),
    )(ef_t, mask_t, batch_row, w1t, b1c, w2t, b2c, w3t, b3c)

    # --- combine per-core partials + tiny classifier head (plain JAX) ---------
    pooled = jnp.max(partials, axis=0)                       # (B, H), >= 0
    out = pooled @ params["wout"] + params["bout"]           # (B, C)
    return out if logits else jax.nn.log_softmax(out, axis=-1)


def _reference_forward(x, edge_index, batch, pos, params, num_graphs, logits=True):
    """Pure-JAX f32 reference of the same forward pass."""
    src, dst = edge_index[0], edge_index[1]
    ef = jnp.concatenate([x[src], pos[src] - pos[dst]], axis=1)
    h = jax.nn.relu(ef @ params["w1"] + params["b1"])
    h = jax.nn.relu(h @ params["w2"] + params["b2"])
    node = jnp.full((x.shape[0], h.shape[1]), -jnp.inf).at[dst].max(h)
    node = jnp.where(jnp.isfinite(node), node, 0.0)
    node = jax.nn.relu(node @ params["w3"] + params["b3"])
    pooled = jnp.full((num_graphs, node.shape[1]), -jnp.inf).at[batch].max(node)
    pooled = jnp.where(jnp.isfinite(pooled), pooled, 0.0)
    out = pooled @ params["wout"] + params["bout"]
    return out if logits else jax.nn.log_softmax(out, axis=-1)


if __name__ == "__main__":
    N, F_IN, POS_D = 2500, 3, 2          # nodes, input feats, position dims
    HIDDEN, CLASSES, GRAPHS = 32, 4, 2

    key = jax.random.PRNGKey(0)
    kx, kp, kn0, kn1, kparam = jax.random.split(key, 5)

    x = jax.random.normal(kx, (N, F_IN), jnp.float32)
    pos = jax.random.uniform(kp, (N, POS_D), jnp.float32)
    half = N // 2
    batch = jnp.concatenate([jnp.zeros(half, jnp.int32),
                             jnp.ones(N - half, jnp.int32)])

    # Static edge_index: self-loop + 2 random intra-graph in-edges per node (K=3).
    nbr0 = jax.random.randint(kn0, (2 * half,), 0, half).astype(jnp.int32)
    nbr1 = jax.random.randint(kn1, (2 * (N - half),), half, N).astype(jnp.int32)
    src = jnp.concatenate([jnp.arange(N, dtype=jnp.int32), nbr0, nbr1])
    dst = jnp.concatenate([
        jnp.arange(N, dtype=jnp.int32),
        jnp.tile(jnp.arange(half, dtype=jnp.int32), 2),
        jnp.tile(jnp.arange(half, N, dtype=jnp.int32), 2),
    ])
    edge_index = jnp.stack([src, dst])                      # (2, 3N)

    params = init_params(kparam, F_IN, POS_D, HIDDEN, CLASSES)

    raw_logits = loc_only_net_explain(x, edge_index, batch, pos, params,
                                      num_graphs=GRAPHS, logits=True)
    log_probs = loc_only_net_explain(x, edge_index, batch, pos, params,
                                     num_graphs=GRAPHS, logits=False)
    jax.block_until_ready((raw_logits, log_probs))

    assert raw_logits.shape == (GRAPHS, CLASSES)
    assert log_probs.shape == (GRAPHS, CLASSES)

    ref_logits = _reference_forward(x, edge_index, batch, pos, params, GRAPHS, True)
    ref_logp = _reference_forward(x, edge_index, batch, pos, params, GRAPHS, False)
    # bf16 storage of edge features / weights (f32 accumulation) vs pure-f32 ref.
    assert jnp.allclose(raw_logits, ref_logits, atol=2e-1, rtol=2e-1)
    assert jnp.allclose(log_probs, ref_logp, atol=2e-1, rtol=2e-1)

    print("KERNEL_OK")
</pallas_src>

<mosaic_0001>
module attributes {stable_mosaic.version = 11 : i64} {
  func.func @_pointnet_pool_kernel(%arg0: i32, %arg1: i32, %arg2: memref<3x5x512xbf16, #tpu.memory_space<vmem>>, %arg3: memref<3x512xf32, #tpu.memory_space<vmem>>, %arg4: memref<1x512xi32, #tpu.memory_space<vmem>>, %arg5: memref<32x5xbf16, #tpu.memory_space<vmem>>, %arg6: memref<32x1xf32, #tpu.memory_space<vmem>>, %arg7: memref<32x32xbf16, #tpu.memory_space<vmem>>, %arg8: memref<32x1xf32, #tpu.memory_space<vmem>>, %arg9: memref<32x32xbf16, #tpu.memory_space<vmem>>, %arg10: memref<32x1xf32, #tpu.memory_space<vmem>>, %arg11: memref<1x2x32xf32, #tpu.memory_space<vmem>>, %arg12: memref<2x32xf32, #tpu.memory_space<vmem>>) attributes {dimension_semantics = [#tpu.dimension_semantics<parallel>, #tpu.dimension_semantics<arbitrary>], iteration_bounds = array<i64: 2, 3>, scalar_prefetch = 0 : i64, scratch_operands = 1 : i64, tpu.core_type = #tpu.core_type<tc>, window_params = [{transform_indices = @transform_0, window_bounds = array<i64: 3, 5, 512>}, {transform_indices = @transform_1, window_bounds = array<i64: 3, 512>}, {transform_indices = @transform_2, window_bounds = array<i64: 1, 512>}, {pipeline_mode = #tpu.pipeline_mode<synchronous>, transform_indices = @transform_3, window_bounds = array<i64: 32, 5>}, {pipeline_mode = #tpu.pipeline_mode<synchronous>, transform_indices = @transform_4, window_bounds = array<i64: 32, 1>}, {pipeline_mode = #tpu.pipeline_mode<synchronous>, transform_indices = @transform_5, window_bounds = array<i64: 32, 32>}, {pipeline_mode = #tpu.pipeline_mode<synchronous>, transform_indices = @transform_6, window_bounds = array<i64: 32, 1>}, {pipeline_mode = #tpu.pipeline_mode<synchronous>, transform_indices = @transform_7, window_bounds = array<i64: 32, 32>}, {pipeline_mode = #tpu.pipeline_mode<synchronous>, transform_indices = @transform_8, window_bounds = array<i64: 32, 1>}, {transform_indices = @transform_9, window_bounds = array<i64: 1, 2, 32>}]} {
    %c0_i32 = arith.constant 0 : i32
    %0 = arith.cmpi eq, %arg1, %c0_i32 : i32
    %1 = arith.extui %0 : i1 to i32
    %c0_i32_0 = arith.constant 0 : i32
    %2 = arith.cmpi ne, %1, %c0_i32_0 : i32
    scf.if %2 {
      %cst_48 = arith.constant 0.000000e+00 : f32
      %86 = vector.broadcast %cst_48 : f32 to vector<2x32xf32>
      %c0_49 = arith.constant 0 : index
      %c0_50 = arith.constant 0 : index
      %87 = vector.load %arg12[%c0_49, %c0_50] : memref<2x32xf32, #tpu.memory_space<vmem>>, vector<2x32xf32>
      tpu.vector_store %arg12[%c0_49, %c0_50], %86 {strides = array<i32>} : memref<2x32xf32, #tpu.memory_space<vmem>>, vector<2x32xf32>,
    } else {
    }
    %c0 = arith.constant 0 : index
    %c0_1 = arith.constant 0 : index
    %3 = vector.load %arg5[%c0, %c0_1] : memref<32x5xbf16, #tpu.memory_space<vmem>>, vector<32x5xbf16>
    %c0_2 = arith.constant 0 : index
    %c0_3 = arith.constant 0 : index
    %4 = vector.load %arg7[%c0_2, %c0_3] : memref<32x32xbf16, #tpu.memory_space<vmem>>, vector<32x32xbf16>
    %c0_4 = arith.constant 0 : index
    %c0_5 = arith.constant 0 : index
    %5 = vector.load %arg9[%c0_4, %c0_5] : memref<32x32xbf16, #tpu.memory_space<vmem>>, vector<32x32xbf16>
    %c0_6 = arith.constant 0 : index
    %c0_7 = arith.constant 0 : index
    %6 = vector.load %arg6[%c0_6, %c0_7] : memref<32x1xf32, #tpu.memory_space<vmem>>, vector<32x1xf32>
    %c0_8 = arith.constant 0 : index
    %c0_9 = arith.constant 0 : index
    %7 = vector.load %arg8[%c0_8, %c0_9] : memref<32x1xf32, #tpu.memory_space<vmem>>, vector<32x1xf32>
    %c0_10 = arith.constant 0 : index
    %c0_11 = arith.constant 0 : index
    %8 = vector.load %arg10[%c0_10, %c0_11] : memref<32x1xf32, #tpu.memory_space<vmem>>, vector<32x1xf32>
    %cst = arith.constant 0.000000e+00 : f32
    %9 = vector.broadcast %cst : f32 to vector<32x512xf32>
    %c0_12 = arith.constant 0 : index
    %c0_13 = arith.constant 0 : index
    %c0_14 = arith.constant 0 : index
    %10 = vector.load %arg2[%c0_12, %c0_13, %c0_14] : memref<3x5x512xbf16, #tpu.memory_space<vmem>>, vector<1x5x512xbf16>
    %11 = vector.shape_cast %10 : vector<1x5x512xbf16> to vector<5x512xbf16>
    %cst_15 = arith.constant dense<0.000000e+00> : vector<32x512xf32>
    %12 = tpu.matmul %3, %11, %cst_15 {dimension_numbers = #tpu.dot_dimension_numbers<[1], [0], [0], [1], [0, 0, 1, 1], [], []>} : vector<32x5xbf16>, vector<5x512xbf16>, vector<32x512xf32> -> vector<32x512xf32>
    %13 = vector.broadcast %6 : vector<32x1xf32> to vector<32x512xf32>
    %14 = arith.addf %12, %13 : vector<32x512xf32>
    %cst_16 = arith.constant 0.000000e+00 : f32
    %15 = vector.broadcast %cst_16 : f32 to vector<32x512xf32>
    %16 = arith.maximumf %14, %15 : vector<32x512xf32>
    %17 = arith.truncf %16 : vector<32x512xf32> to vector<32x512xbf16>
    %cst_17 = arith.constant dense<0.000000e+00> : vector<32x512xf32>
    %18 = tpu.matmul %4, %17, %cst_17 {dimension_numbers = #tpu.dot_dimension_numbers<[1], [0], [0], [1], [0, 0, 1, 1], [], []>} : vector<32x32xbf16>, vector<32x512xbf16>, vector<32x512xf32> -> vector<32x512xf32>
    %19 = vector.broadcast %7 : vector<32x1xf32> to vector<32x512xf32>
    %20 = arith.addf %18, %19 : vector<32x512xf32>
    %cst_18 = arith.constant 0.000000e+00 : f32
    %21 = vector.broadcast %cst_18 : f32 to vector<32x512xf32>
    %22 = arith.maximumf %20, %21 : vector<32x512xf32>
    %c0_19 = arith.constant 0 : index
    %c0_20 = arith.constant 0 : index
    %23 = vector.load %arg3[%c0_19, %c0_20] : memref<3x512xf32, #tpu.memory_space<vmem>>, vector<1x512xf32>
    %24 = vector.broadcast %23 : vector<1x512xf32> to vector<32x512xf32>
    %25 = arith.mulf %22, %24 : vector<32x512xf32>
    %26 = arith.maximumf %9, %25 : vector<32x512xf32>
    %c1 = arith.constant 1 : index
    %c0_21 = arith.constant 0 : index
    %c0_22 = arith.constant 0 : index
    %27 = vector.load %arg2[%c1, %c0_21, %c0_22] : memref<3x5x512xbf16, #tpu.memory_space<vmem>>, vector<1x5x512xbf16>
    %28 = vector.shape_cast %27 : vector<1x5x512xbf16> to vector<5x512xbf16>
    %cst_23 = arith.constant dense<0.000000e+00> : vector<32x512xf32>
    %29 = tpu.matmul %3, %28, %cst_23 {dimension_numbers = #tpu.dot_dimension_numbers<[1], [0], [0], [1], [0, 0, 1, 1], [], []>} : vector<32x5xbf16>, vector<5x512xbf16>, vector<32x512xf32> -> vector<32x512xf32>
    %30 = vector.broadcast %6 : vector<32x1xf32> to vector<32x512xf32>
    %31 = arith.addf %29, %30 : vector<32x512xf32>
    %cst_24 = arith.constant 0.000000e+00 : f32
    %32 = vector.broadcast %cst_24 : f32 to vector<32x512xf32>
    %33 = arith.maximumf %31, %32 : vector<32x512xf32>
    %34 = arith.truncf %33 : vector<32x512xf32> to vector<32x512xbf16>
    %cst_25 = arith.constant dense<0.000000e+00> : vector<32x512xf32>
    %35 = tpu.matmul %4, %34, %cst_25 {dimension_numbers = #tpu.dot_dimension_numbers<[1], [0], [0], [1], [0, 0, 1, 1], [], []>} : vector<32x32xbf16>, vector<32x512xbf16>, vector<32x512xf32> -> vector<32x512xf32>
    %36 = vector.broadcast %7 : vector<32x1xf32> to vector<32x512xf32>
    %37 = arith.addf %35, %36 : vector<32x512xf32>
    %cst_26 = arith.constant 0.000000e+00 : f32
    %38 = vector.broadcast %cst_26 : f32 to vector<32x512xf32>
    %39 = arith.maximumf %37, %38 : vector<32x512xf32>
    %c1_27 = arith.constant 1 : index
    %c0_28 = arith.constant 0 : index
    %40 = vector.load %arg3[%c1_27, %c0_28] : memref<3x512xf32, #tpu.memory_space<vmem>>, vector<1x512xf32>
    %41 = vector.broadcast %40 : vector<1x512xf32> to vector<32x512xf32>
    %42 = arith.mulf %39, %41 : vector<32x512xf32>
    %43 = arith.maximumf %26, %42 : vector<32x512xf32>
    %c2 = arith.constant 2 : index
    %c0_29 = arith.constant 0 : index
    %c0_30 = arith.constant 0 : index
    %44 = vector.load %arg2[%c2, %c0_29, %c0_30] : memref<3x5x512xbf16, #tpu.memory_space<vmem>>, vector<1x5x512xbf16>
    %45 = vector.shape_cast %44 : vector<1x5x512xbf16> to vector<5x512xbf16>
    %cst_31 = arith.constant dense<0.000000e+00> : vector<32x512xf32>
    %46 = tpu.matmul %3, %45, %cst_31 {dimension_numbers = #tpu.dot_dimension_numbers<[1], [0], [0], [1], [0, 0, 1, 1], [], []>} : vector<32x5xbf16>, vector<5x512xbf16>, vector<32x512xf32> -> vector<32x512xf32>
    %47 = vector.broadcast %6 : vector<32x1xf32> to vector<32x512xf32>
    %48 = arith.addf %46, %47 : vector<32x512xf32>
    %cst_32 = arith.constant 0.000000e+00 : f32
    %49 = vector.broadcast %cst_32 : f32 to vector<32x512xf32>
    %50 = arith.maximumf %48, %49 : vector<32x512xf32>
    %51 = arith.truncf %50 : vector<32x512xf32> to vector<32x512xbf16>
    %cst_33 = arith.constant dense<0.000000e+00> : vector<32x512xf32>
    %52 = tpu.matmul %4, %51, %cst_33 {dimension_numbers = #tpu.dot_dimension_numbers<[1], [0], [0], [1], [0, 0, 1, 1], [], []>} : vector<32x32xbf16>, vector<32x512xbf16>, vector<32x512xf32> -> vector<32x512xf32>
    %53 = vector.broadcast %7 : vector<32x1xf32> to vector<32x512xf32>
    %54 = arith.addf %52, %53 : vector<32x512xf32>
    %cst_34 = arith.constant 0.000000e+00 : f32
    %55 = vector.broadcast %cst_34 : f32 to vector<32x512xf32>
    %56 = arith.maximumf %54, %55 : vector<32x512xf32>
    %c2_35 = arith.constant 2 : index
    %c0_36 = arith.constant 0 : index
    %57 = vector.load %arg3[%c2_35, %c0_36] : memref<3x512xf32, #tpu.memory_space<vmem>>, vector<1x512xf32>
    %58 = vector.broadcast %57 : vector<1x512xf32> to vector<32x512xf32>
    %59 = arith.mulf %56, %58 : vector<32x512xf32>
    %60 = arith.maximumf %43, %59 : vector<32x512xf32>
    %61 = arith.truncf %60 : vector<32x512xf32> to vector<32x512xbf16>
    %cst_37 = arith.constant dense<0.000000e+00> : vector<32x512xf32>
    %62 = tpu.matmul %5, %61, %cst_37 {dimension_numbers = #tpu.dot_dimension_numbers<[1], [0], [0], [1], [0, 0, 1, 1], [], []>} : vector<32x32xbf16>, vector<32x512xbf16>, vector<32x512xf32> -> vector<32x512xf32>
    %63 = vector.broadcast %8 : vector<32x1xf32> to vector<32x512xf32>
    %64 = arith.addf %62, %63 : vector<32x512xf32>
    %cst_38 = arith.constant 0.000000e+00 : f32
    %65 = vector.broadcast %cst_38 : f32 to vector<32x512xf32>
    %66 = arith.maximumf %64, %65 : vector<32x512xf32>
    %c0_39 = arith.constant 0 : index
    %c0_40 = arith.constant 0 : index
    %67 = vector.load %arg4[%c0_39, %c0_40] : memref<1x512xi32, #tpu.memory_space<vmem>>, vector<1x512xi32>
    %68 = tpu.iota {dimensions = array<i32: 0>} : vector<2x1x512xi32>
    %69 = vector.shape_cast %67 : vector<1x512xi32> to vector<1x1x512xi32>
    %70 = vector.broadcast %69 : vector<1x1x512xi32> to vector<2x1x512xi32>
    %71 = arith.cmpi eq, %68, %70 : vector<2x1x512xi32>
    %72 = vector.shape_cast %66 : vector<32x512xf32> to vector<1x32x512xf32>
    %cst_41 = arith.constant 0.000000e+00 : f32
    %73 = vector.shape_cast %71 : vector<2x1x512xi1> to vector<2x1x512xi1>
    %74 = vector.broadcast %73 : vector<2x1x512xi1> to vector<2x32x512xi1>
    %75 = vector.shape_cast %72 : vector<1x32x512xf32> to vector<1x32x512xf32>
    %76 = vector.broadcast %75 : vector<1x32x512xf32> to vector<2x32x512xf32>
    %77 = vector.broadcast %cst_41 : f32 to vector<2x32x512xf32>
    %78 = arith.select %74, %76, %77 : vector<2x32x512xi1>, vector<2x32x512xf32>
    %c0_42 = arith.constant 0 : index
    %c0_43 = arith.constant 0 : index
    %79 = vector.load %arg12[%c0_42, %c0_43] : memref<2x32xf32, #tpu.memory_space<vmem>>, vector<2x32xf32>
    %cst_44 = arith.constant dense<0xFF800000> : vector<2x32xf32>
    %80 = vector.multi_reduction <maximumf>, %78, %cst_44 [2] : vector<2x32x512xf32> to vector<2x32xf32>
    %81 = arith.maximumf %79, %80 : vector<2x32xf32>
    %c0_45 = arith.constant 0 : index
    %c0_46 = arith.constant 0 : index
    %82 = vector.load %arg12[%c0_45, %c0_46] : memref<2x32xf32, #tpu.memory_space<vmem>>, vector<2x32xf32>
    tpu.vector_store %arg12[%c0_45, %c0_46], %81 {strides = array<i32>} : memref<2x32xf32, #tpu.memory_space<vmem>>, vector<2x32xf32>,
    %c2_i32 = arith.constant 2 : i32
    %83 = arith.cmpi eq, %arg1, %c2_i32 : i32
    %84 = arith.extui %83 : i1 to i32
    %c0_i32_47 = arith.constant 0 : i32
    %85 = arith.cmpi ne, %84, %c0_i32_47 : i32
    scf.if %85 {
      %c0_48 = arith.constant 0 : index
      %c0_49 = arith.constant 0 : index
      %86 = vector.load %arg12[%c0_48, %c0_49] : memref<2x32xf32, #tpu.memory_space<vmem>>, vector<2x32xf32>
      %c0_50 = arith.constant 0 : index
      %c0_51 = arith.constant 0 : index
      %c0_52 = arith.constant 0 : index
      %87 = vector.load %arg11[%c0_50, %c0_51, %c0_52] : memref<1x2x32xf32, #tpu.memory_space<vmem>>, vector<1x2x32xf32>
      %88 = vector.shape_cast %87 : vector<1x2x32xf32> to vector<2x32xf32>
      %89 = vector.shape_cast %86 : vector<2x32xf32> to vector<1x2x32xf32>
      tpu.vector_store %arg11[%c0_50, %c0_51, %c0_52], %89 {strides = array<i32>} : memref<1x2x32xf32, #tpu.memory_space<vmem>>, vector<1x2x32xf32>,
    } else {
    }
    return
  }
  func.func @transform_0(%arg0: i32, %arg1: i32) -> (i32, i32, i32) {
    %c3_i32 = arith.constant 3 : i32
    %0 = arith.muli %arg0, %c3_i32 : i32
    %1 = arith.addi %0, %arg1 : i32
    %c0_i32 = arith.constant 0 : i32
    %c0_i32_0 = arith.constant 0 : i32
    %c0_i32_1 = arith.constant 0 : i32
    return %c0_i32, %c0_i32_0, %1 : i32, i32, i32
  }
  func.func @transform_1(%arg0: i32, %arg1: i32) -> (i32, i32) {
    %c3_i32 = arith.constant 3 : i32
    %0 = arith.muli %arg0, %c3_i32 : i32
    %1 = arith.addi %0, %arg1 : i32
    %c0_i32 = arith.constant 0 : i32
    %c0_i32_0 = arith.constant 0 : i32
    return %c0_i32, %1 : i32, i32
  }
  func.func @transform_2(%arg0: i32, %arg1: i32) -> (i32, i32) {
    %c3_i32 = arith.constant 3 : i32
    %0 = arith.muli %arg0, %c3_i32 : i32
    %1 = arith.addi %0, %arg1 : i32
    %c0_i32 = arith.constant 0 : i32
    %c0_i32_0 = arith.constant 0 : i32
    return %c0_i32, %1 : i32, i32
  }
  func.func @transform_3(%arg0: i32, %arg1: i32) -> (i32, i32) {
    %c0_i32 = arith.constant 0 : i32
    %c0_i32_0 = arith.constant 0 : i32
    %c0_i32_1 = arith.constant 0 : i32
    return %c0_i32, %c0_i32_0 : i32, i32
  }
  func.func @transform_4(%arg0: i32, %arg1: i32) -> (i32, i32) {
    %c0_i32 = arith.constant 0 : i32
    %c0_i32_0 = arith.constant 0 : i32
    %c0_i32_1 = arith.constant 0 : i32
    return %c0_i32, %c0_i32_0 : i32, i32
  }
  func.func @transform_5(%arg0: i32, %arg1: i32) -> (i32, i32) {
    %c0_i32 = arith.constant 0 : i32
    %c0_i32_0 = arith.constant 0 : i32
    %c0_i32_1 = arith.constant 0 : i32
    return %c0_i32, %c0_i32_0 : i32, i32
  }
  func.func @transform_6(%arg0: i32, %arg1: i32) -> (i32, i32) {
    %c0_i32 = arith.constant 0 : i32
    %c0_i32_0 = arith.constant 0 : i32
    %c0_i32_1 = arith.constant 0 : i32
    return %c0_i32, %c0_i32_0 : i32, i32
  }
  func.func @transform_7(%arg0: i32, %arg1: i32) -> (i32, i32) {
    %c0_i32 = arith.constant 0 : i32
    %c0_i32_0 = arith.constant 0 : i32
    %c0_i32_1 = arith.constant 0 : i32
    return %c0_i32, %c0_i32_0 : i32, i32
  }
  func.func @transform_8(%arg0: i32, %arg1: i32) -> (i32, i32) {
    %c0_i32 = arith.constant 0 : i32
    %c0_i32_0 = arith.constant 0 : i32
    %c0_i32_1 = arith.constant 0 : i32
    return %c0_i32, %c0_i32_0 : i32, i32
  }
  func.func @transform_9(%arg0: i32, %arg1: i32) -> (i32, i32, i32) {
    %c0_i32 = arith.constant 0 : i32
    %c0_i32_0 = arith.constant 0 : i32
    %c0_i32_1 = arith.constant 0 : i32
    return %arg0, %c0_i32, %c0_i32_0 : i32, i32, i32
  }
}

</mosaic_0001>

<llo_original>
// kernel: tpu_custom_call.1
$region0: #{tpu_custom_call.1}
  #allocation0 [shape = 'u32[]', space=smem, size = 0x4, offset = 0x4, fixed_abs, tag = 'smem constant byte address 0x4 - core index']
  #allocation1 [shape = 'u32[144,128]{1,0:T(1,128)}', space=vmem, size = 0x12000, scoped, tag = 'internal scratch']
  #allocation2 [shape = 'f32[2,32]{1,0:T(2,128)}', space=vmem, size = 0x400, scoped, tag = 'scratch operand']
  %s0 = inlined_call_operand.vmem [shape: bf16[3,5,3072], index: 0, kind: input, shape index: {}]
  %s1 = inlined_call_operand.vmem [shape: f32[3,3072], index: 1, kind: input, shape index: {}]
  %s2 = inlined_call_operand.vmem [shape: s32[1,3072], index: 2, kind: input, shape index: {}]
  %s3 = inlined_call_operand.vmem [shape: bf16[32,5], index: 3, kind: input, shape index: {}]
  %s4 = inlined_call_operand.vmem [shape: f32[32,1], index: 4, kind: input, shape index: {}]
  %s5 = inlined_call_operand.vmem [shape: bf16[32,32], index: 5, kind: input, shape index: {}]
  %s6 = inlined_call_operand.vmem [shape: f32[32,1], index: 6, kind: input, shape index: {}]
  %s7 = inlined_call_operand.vmem [shape: bf16[32,32], index: 7, kind: input, shape index: {}]
  %s8 = inlined_call_operand.vmem [shape: f32[32,1], index: 8, kind: input, shape index: {}]
  %s9 = inlined_call_operand.hbm [shape: f32[2,2,32], index: 9, kind: output, shape index: {}]
  %s10 = sld [smem:[#allocation0]]
  $region100: #{tpu_custom_call.1} parent=0
    _
  %s12 = ssub.s32 1, %s10
  %s13 = scalar_select 0, %s12, %s10
  $region1: #{tpu_custom_call.1} parent=0
    #allocation3 [shape = 'u8[49152]{0}', space=vmem, size = 0xc000, scoped, tag = 'input window, operand 0']
    #allocation4 [shape = 'u8[2048]{0}', space=vmem, size = 0x800, scoped, tag = 'output window, operand 0']
    #allocation5 [shape = 's32[2]{0}', space=sflag, size = 0x8, scoped, tag = 'scoped memory for tpu_custom_call.1']
    %14 = vsyncpa [#allocation5], 0
    %s15 = scalar_lea.sflag [#allocation5], 1
    %16 = vsyncpa %s15, 0
    loop: start=0, step=1, limit=8
    $region2: #{tpu_custom_call.1} parent=1 // loop_pre_header
      _
    $region3: #{tpu_custom_call.1} parent=1 // loop_header
      %s18 = sphi 0, %s22
      %p19 = scmp.ge.s32.totalorder %s18, 8
      %s25 = sphi 0, %s37
      %s26 = sphi 0, %s33
      %s27 = sphi 0, %s25
      %s28 = sphi 0, %s26
      %s29 = sphi 0, %s27
      %s30 = sphi 0, %s28
      %s44 = sphi 0, %s46
      %s47 = sphi 0, %s44
      %s48 = sphi 0, %s47
      %s64 = sphi 0, %s48
      %s74 = sphi 0, %s76
      %s77 = sphi 0, %s74
      %s78 = sphi 0, %s77
      %s94 = sphi 0, %s78
      %s104 = sphi 0, %s106
      %s107 = sphi 0, %s104
      %s108 = sphi 0, %s107
      %s124 = sphi 0, %s108
      %s128 = sphi 0, %s128
      %s130 = sphi 0, %s128
      %s131 = sphi 0, %s130
      %s145 = sphi 0, %s131
      %s149 = sphi 0, %s149
      %s151 = sphi 0, %s149
      %s152 = sphi 0, %s151
      %s166 = sphi 0, %s152
      %s170 = sphi 0, %s170
      %s172 = sphi 0, %s170
      %s173 = sphi 0, %s172
      %s187 = sphi 0, %s173
      %s191 = sphi 0, %s191
      %s193 = sphi 0, %s191
      %s194 = sphi 0, %s193
      %s208 = sphi 0, %s194
      %s212 = sphi 0, %s212
      %s214 = sphi 0, %s212
      %s215 = sphi 0, %s214
      %s229 = sphi 0, %s215
      %s233 = sphi 0, %s233
      %s235 = sphi 0, %s233
      %s236 = sphi 0, %s235
      %s250 = sphi 0, %s236
      %s256 = sphi 0, %s258
      %s259 = sphi 0, %s256
      %s260 = sphi 0, %s259
      %s276 = sphi 0, %s260
    $region4: #{tpu_custom_call.1} parent=1 // loop_header_branch
      %21 = sbr.rel (%p19) target = $region8
    $region5: #{tpu_custom_call.1} parent=1 // loop_body
      %s23 = ssub.s32 %s18, 1
      %s24 = ssub.s32 %s18, 2
      %s31 = sadd.s32 1, %s26
      %p32 = scmp.ge.s32.totalorder %s31, 3
      %s33 = scalar_select %p32, 0, %s31
      %s34 = sadd.s32 1, %s25
      %s35 = scalar_select %p32, %s34, %s25
      %p36 = scmp.ge.s32.totalorder %s35, 2
      %s37 = scalar_select %p36, 0, %s35
      %s38 = smul.u32 %s25, 3
      %s39 = sadd.s32 %s38, %s26
      %s40 = smul.u32 %s37, 3
      %s41 = sadd.s32 %s40, %s33
      %s42 = ssub.s32 %s39, %s41
      %p43 = scmp.eq.s32.totalorder %s42, 0
      %s45 = sadd.s32 %s44, 1
      %s46 = scalar_select %p43, %s44, %s45
      %p49 = pneg %p43
      %p50 = scmp.eq.s32.totalorder %s18, 5
      %p51 = por %p49, %p50
      %p52 = scmp.ne.s32.totalorder %s44, %s47
      %p53 = scmp.eq.s32.totalorder %s18, 0
      %p54 = por %p52, %p53
      %p55 = scmp.ne.s32.totalorder %s44, %s47
      %p56 = scmp.eq.s32.totalorder %s23, 5
      %p57 = por %p55, %p56
      %p58 = scmp.ne.s32.totalorder %s47, %s48
      %p59 = scmp.eq.s32.totalorder %s23, 0
      %p60 = por %p58, %p59
      %p61 = scmp.ne.s32.totalorder %s47, %s48
      %p62 = scmp.eq.s32.totalorder %s24, 5
      %p63 = por %p61, %p62
      %p65 = scmp.ne.s32.totalorder %s48, %s64
      %p66 = scmp.eq.s32.totalorder %s24, 0
      %p67 = por %p65, %p66
      %s68 = smul.u32 %s25, 3
      %s69 = sadd.s32 %s68, %s26
      %s70 = smul.u32 %s37, 3
      %s71 = sadd.s32 %s70, %s33
      %s72 = ssub.s32 %s69, %s71
      %p73 = scmp.eq.s32.totalorder %s72, 0
      %s75 = sadd.s32 %s74, 1
      %s76 = scalar_select %p73, %s74, %s75
      %p79 = pneg %p73
      %p80 = scmp.eq.s32.totalorder %s18, 5
      %p81 = por %p79, %p80
      %p82 = scmp.ne.s32.totalorder %s74, %s77
      %p83 = scmp.eq.s32.totalorder %s18, 0
      %p84 = por %p82, %p83
      %p85 = scmp.ne.s32.totalorder %s74, %s77
      %p86 = scmp.eq.s32.totalorder %s23, 5
      %p87 = por %p85, %p86
      %p88 = scmp.ne.s32.totalorder %s77, %s78
      %p89 = scmp.eq.s32.totalorder %s23, 0
      %p90 = por %p88, %p89
      %p91 = scmp.ne.s32.totalorder %s77, %s78
      %p92 = scmp.eq.s32.totalorder %s24, 5
      %p93 = por %p91, %p92
      %p95 = scmp.ne.s32.totalorder %s78, %s94
      %p96 = scmp.eq.s32.totalorder %s24, 0
      %p97 = por %p95, %p96
      %s98 = smul.u32 %s25, 3
      %s99 = sadd.s32 %s98, %s26
      %s100 = smul.u32 %s37, 3
      %s101 = sadd.s32 %s100, %s33
      %s102 = ssub.s32 %s99, %s101
      %p103 = scmp.eq.s32.totalorder %s102, 0
      %s105 = sadd.s32 %s104, 1
      %s106 = scalar_select %p103, %s104, %s105
      %p109 = pneg %p103
      %p110 = scmp.eq.s32.totalorder %s18, 5
      %p111 = por %p109, %p110
      %p112 = scmp.ne.s32.totalorder %s104, %s107
      %p113 = scmp.eq.s32.totalorder %s18, 0
      %p114 = por %p112, %p113
      %p115 = scmp.ne.s32.totalorder %s104, %s107
      %p116 = scmp.eq.s32.totalorder %s23, 5
      %p117 = por %p115, %p116
      %p118 = scmp.ne.s32.totalorder %s107, %s108
      %p119 = scmp.eq.s32.totalorder %s23, 0
      %p120 = por %p118, %p119
      %p121 = scmp.ne.s32.totalorder %s107, %s108
      %p122 = scmp.eq.s32.totalorder %s24, 5
      %p123 = por %p121, %p122
      %p125 = scmp.ne.s32.totalorder %s108, %s124
      %p126 = scmp.eq.s32.totalorder %s24, 0
      %p127 = por %p125, %p126
      %s129 = sadd.s32 %s128, 1
      %p132 = scmp.eq.s32.totalorder %s18, 5
      %p133 = scmp.ne.s32.totalorder %s128, %s130
      %p134 = scmp.eq.s32.totalorder %s18, 0
      %p135 = por %p133, %p134
      %p136 = scmp.ne.s32.totalorder %s128, %s130
      %p137 = scmp.eq.s32.totalorder %s23, 5
      %p138 = por %p136, %p137
      %p139 = scmp.ne.s32.totalorder %s130, %s131
      %p140 = scmp.eq.s32.totalorder %s23, 0
      %p141 = por %p139, %p140
      %p142 = scmp.ne.s32.totalorder %s130, %s131
      %p143 = scmp.eq.s32.totalorder %s24, 5
      %p144 = por %p142, %p143
      %p146 = scmp.ne.s32.totalorder %s131, %s145
      %p147 = scmp.eq.s32.totalorder %s24, 0
      %p148 = por %p146, %p147
      %s150 = sadd.s32 %s149, 1
      %p153 = scmp.eq.s32.totalorder %s18, 5
      %p154 = scmp.ne.s32.totalorder %s149, %s151
      %p155 = scmp.eq.s32.totalorder %s18, 0
      %p156 = por %p154, %p155
      %p157 = scmp.ne.s32.totalorder %s149, %s151
      %p158 = scmp.eq.s32.totalorder %s23, 5
      %p159 = por %p157, %p158
      %p160 = scmp.ne.s32.totalorder %s151, %s152
      %p161 = scmp.eq.s32.totalorder %s23, 0
      %p162 = por %p160, %p161
      %p163 = scmp.ne.s32.totalorder %s151, %s152
      %p164 = scmp.eq.s32.totalorder %s24, 5
      %p165 = por %p163, %p164
      %p167 = scmp.ne.s32.totalorder %s152, %s166
      %p168 = scmp.eq.s32.totalorder %s24, 0
      %p169 = por %p167, %p168
      %s171 = sadd.s32 %s170, 1
      %p174 = scmp.eq.s32.totalorder %s18, 5
      %p175 = scmp.ne.s32.totalorder %s170, %s172
      %p176 = scmp.eq.s32.totalorder %s18, 0
      %p177 = por %p175, %p176
      %p178 = scmp.ne.s32.totalorder %s170, %s172
      %p179 = scmp.eq.s32.totalorder %s23, 5
      %p180 = por %p178, %p179
      %p181 = scmp.ne.s32.totalorder %s172, %s173
      %p182 = scmp.eq.s32.totalorder %s23, 0
      %p183 = por %p181, %p182
      %p184 = scmp.ne.s32.totalorder %s172, %s173
      %p185 = scmp.eq.s32.totalorder %s24, 5
      %p186 = por %p184, %p185
      %p188 = scmp.ne.s32.totalorder %s173, %s187
      %p189 = scmp.eq.s32.totalorder %s24, 0
      %p190 = por %p188, %p189
      %s192 = sadd.s32 %s191, 1
      %p195 = scmp.eq.s32.totalorder %s18, 5
      %p196 = scmp.ne.s32.totalorder %s191, %s193
      %p197 = scmp.eq.s32.totalorder %s18, 0
      %p198 = por %p196, %p197
      %p199 = scmp.ne.s32.totalorder %s191, %s193
      %p200 = scmp.eq.s32.totalorder %s23, 5
      %p201 = por %p199, %p200
      %p202 = scmp.ne.s32.totalorder %s193, %s194
      %p203 = scmp.eq.s32.totalorder %s23, 0
      %p204 = por %p202, %p203
      %p205 = scmp.ne.s32.totalorder %s193, %s194
      %p206 = scmp.eq.s32.totalorder %s24, 5
      %p207 = por %p205, %p206
      %p209 = scmp.ne.s32.totalorder %s194, %s208
      %p210 = scmp.eq.s32.totalorder %s24, 0
      %p211 = por %p209, %p210
      %s213 = sadd.s32 %s212, 1
      %p216 = scmp.eq.s32.totalorder %s18, 5
      %p217 = scmp.ne.s32.totalorder %s212, %s214
      %p218 = scmp.eq.s32.totalorder %s18, 0
      %p219 = por %p217, %p218
      %p220 = scmp.ne.s32.totalorder %s212, %s214
      %p221 = scmp.eq.s32.totalorder %s23, 5
      %p222 = por %p220, %p221
      %p223 = scmp.ne.s32.totalorder %s214, %s215
      %p224 = scmp.eq.s32.totalorder %s23, 0
      %p225 = por %p223, %p224
      %p226 = scmp.ne.s32.totalorder %s214, %s215
      %p227 = scmp.eq.s32.totalorder %s24, 5
      %p228 = por %p226, %p227
      %p230 = scmp.ne.s32.totalorder %s215, %s229
      %p231 = scmp.eq.s32.totalorder %s24, 0
      %p232 = por %p230, %p231
      %s234 = sadd.s32 %s233, 1
      %p237 = scmp.eq.s32.totalorder %s18, 5
      %p238 = scmp.ne.s32.totalorder %s233, %s235
      %p239 = scmp.eq.s32.totalorder %s18, 0
      %p240 = por %p238, %p239
      %p241 = scmp.ne.s32.totalorder %s233, %s235
      %p242 = scmp.eq.s32.totalorder %s23, 5
      %p243 = por %p241, %p242
      %p244 = scmp.ne.s32.totalorder %s235, %s236
      %p245 = scmp.eq.s32.totalorder %s23, 0
      %p246 = por %p244, %p245
      %p247 = scmp.ne.s32.totalorder %s235, %s236
      %p248 = scmp.eq.s32.totalorder %s24, 5
      %p249 = por %p247, %p248
      %p251 = scmp.ne.s32.totalorder %s236, %s250
      %p252 = scmp.eq.s32.totalorder %s24, 0
      %p253 = por %p251, %p252
      %s254 = ssub.s32 %s25, %s37
      %p255 = scmp.eq.s32.totalorder %s254, 0
      %s257 = sadd.s32 %s256, 1
      %s258 = scalar_select %p255, %s256, %s257
      %p261 = pneg %p255
      %p262 = scmp.eq.s32.totalorder %s18, 5
      %p263 = por %p261, %p262
      %p264 = scmp.ne.s32.totalorder %s256, %s259
      %p265 = scmp.eq.s32.totalorder %s18, 0
      %p266 = por %p264, %p265
      %p267 = scmp.ne.s32.totalorder %s256, %s259
      %p268 = scmp.eq.s32.totalorder %s23, 5
      %p269 = por %p267, %p268
      %p270 = scmp.ne.s32.totalorder %s259, %s260
      %p271 = scmp.eq.s32.totalorder %s23, 0
      %p272 = por %p270, %p271
      %p273 = scmp.ne.s32.totalorder %s259, %s260
      %p274 = scmp.eq.s32.totalorder %s24, 5
      %p275 = por %p273, %p274
      %p277 = scmp.ne.s32.totalorder %s260, %s276
      %p278 = scmp.eq.s32.totalorder %s24, 0
      %p279 = por %p277, %p278
      %p280 = scmp.le.s32.totalorder 1, %s18
      %p281 = scmp.lt.s32.totalorder %s18, 7
      %p282 = pnand %p280, %p281
      %p283 = pneg %p282
      // Predicated region
      $region9: #{tpu_custom_call.1} parent=5 // pred_check
        _
      $region10: #{tpu_custom_call.1} parent=5 // pred_check_branch
        %285 = sbr.rel (%p282) target = $region12
      $region11: #{tpu_custom_call.1} parent=5 // pred_region
        %s286 = ssub.s32 %s18, 1
        // Predicated region
        $region13: #{tpu_custom_call.1} parent=11 // pred_check
          %p287 = pneg %p141
        $region14: #{tpu_custom_call.1} parent=11 // pred_check_branch
          %289 = sbr.rel (%p287) target = $region16
        $region15: #{tpu_custom_call.1} parent=11 // pred_region
          _
        $region16: #{tpu_custom_call.1} parent=11 // pred_fallthru
          _
        // Predicated region
        $region17: #{tpu_custom_call.1} parent=11 // pred_check
          %p290 = pneg %p162
        $region18: #{tpu_custom_call.1} parent=11 // pred_check_branch
          %292 = sbr.rel (%p290) target = $region20
        $region19: #{tpu_custom_call.1} parent=11 // pred_region
          _
        $region20: #{tpu_custom_call.1} parent=11 // pred_fallthru
          _
        // Predicated region
        $region21: #{tpu_custom_call.1} parent=11 // pred_check
          %p293 = pneg %p183
        $region22: #{tpu_custom_call.1} parent=11 // pred_check_branch
          %295 = sbr.rel (%p293) target = $region24
        $region23: #{tpu_custom_call.1} parent=11 // pred_region
          _
        $region24: #{tpu_custom_call.1} parent=11 // pred_fallthru
          _
        // Predicated region
        $region25: #{tpu_custom_call.1} parent=11 // pred_check
          %p296 = pneg %p204
        $region26: #{tpu_custom_call.1} parent=11 // pred_check_branch
          %298 = sbr.rel (%p296) target = $region28
        $region27: #{tpu_custom_call.1} parent=11 // pred_region
          _
        $region28: #{tpu_custom_call.1} parent=11 // pred_fallthru
          _
        // Predicated region
        $region29: #{tpu_custom_call.1} parent=11 // pred_check
          %p299 = pneg %p225
        $region30: #{tpu_custom_call.1} parent=11 // pred_check_branch
          %301 = sbr.rel (%p299) target = $region32
        $region31: #{tpu_custom_call.1} parent=11 // pred_region
          _
        $region32: #{tpu_custom_call.1} parent=11 // pred_fallthru
          _
        // Predicated region
        $region33: #{tpu_custom_call.1} parent=11 // pred_check
          %p302 = pneg %p246
        $region34: #{tpu_custom_call.1} parent=11 // pred_check_branch
          %304 = sbr.rel (%p302) target = $region36
        $region35: #{tpu_custom_call.1} parent=11 // pred_region
          _
        $region36: #{tpu_custom_call.1} parent=11 // pred_fallthru
          _
      $region12: #{tpu_custom_call.1} parent=5 // pred_fallthru
        _
      %p305 = scmp.lt.s32.totalorder %s18, 6
      // Predicated region
      $region37: #{tpu_custom_call.1} parent=5 // pred_check
        %p306 = pneg %p305
      $region38: #{tpu_custom_call.1} parent=5 // pred_check_branch
        %308 = sbr.rel (%p306) target = $region40
      $region39: #{tpu_custom_call.1} parent=5 // pred_region
        // Predicated region
        $region41: #{tpu_custom_call.1} parent=39 // pred_check
          %p309 = pneg %p54
        $region42: #{tpu_custom_call.1} parent=39 // pred_check_branch
          %311 = sbr.rel (%p309) target = $region44
        $region43: #{tpu_custom_call.1} parent=39 // pred_region
          %s312 = sand.u32 %s44, 1
          %s313 = sand.u32 %s44, 1
          %s314 = smul.addr %s313, 48
          %s315 = scalar_lea.vmem [#allocation3], %s314
          %s316 = smul.u32 %s25, 3
          %s317 = sadd.s32 %s316, %s26
          %s318 = smul.u32 4, %s317
          %s319 = smul.addr %s318, 4
          %s320 = scalar_lea.vmem %s0, %s319
          // Predicated region
          $region45: #{tpu_custom_call.1} parent=43 // pred_check
            _
          $region46: #{tpu_custom_call.1} parent=43 // pred_check_branch
            %322 = sbr.rel (0) target = $region48
          $region47: #{tpu_custom_call.1} parent=43 // pred_region
            // Predicated region
            $region49: #{tpu_custom_call.1} parent=47 // pred_check
              _
            $region50: #{tpu_custom_call.1} parent=47 // pred_check_branch
              %324 = sbr.rel (0) target = $region52
            $region51: #{tpu_custom_call.1} parent=47 // pred_region
              loop: start=0, step=1, limit=1
              $region53: #{tpu_custom_call.1} parent=51 // loop_pre_header
                _
              $region54: #{tpu_custom_call.1} parent=51 // loop_header
                %s326 = sphi 0, %s330
                %p327 = scmp.ge.s32.totalorder %s326, 1
                %s331 = sphi %s320, %s320
                %s332 = sphi %s315, %s315
              $region55: #{tpu_custom_call.1} parent=51 // loop_header_branch
                %329 = sbr.rel (%p327) target = $region59
              $region56: #{tpu_custom_call.1} parent=51 // loop_body
                %v333 = vld [vmem:[%s331] sm:$0xff]
                %334 = vst [vmem:[%s332] sm:$0xff] %v333
                %v335 = vld [vmem:[%s331 + $0x8] sm:$0xff]
                %336 = vst [vmem:[%s332 + $0x8] sm:$0xff] %v335
                %v337 = vld [vmem:[%s331 + $0x60] sm:$0xff]
                %338 = vst [vmem:[%s332 + $0x10] sm:$0xff] %v337
                %v339 = vld [vmem:[%s331 + $0x68] sm:$0xff]
                %340 = vst [vmem:[%s332 + $0x18] sm:$0xff] %v339
                %v341 = vld [vmem:[%s331 + $0xc0] sm:$0xff]
                %342 = vst [vmem:[%s332 + $0x20] sm:$0xff] %v341
                %v343 = vld [vmem:[%s331 + $0xc8] sm:$0xff]
                %344 = vst [vmem:[%s332 + $0x28] sm:$0xff] %v343
              $region57: #{tpu_custom_call.1} parent=51 // loop_footer
                %s330 = sadd.s32 1, %s326
              $region58: #{tpu_custom_call.1} parent=51 // loop_footer_branch
                %325 = sbr.rel target = $region54
              $region59: #{tpu_custom_call.1} parent=51 // loop_exit
                _
            $region52: #{tpu_custom_call.1} parent=47 // pred_fallthru
              _
            // Predicated region
            $region60: #{tpu_custom_call.1} parent=47 // pred_check
              _
            $region61: #{tpu_custom_call.1} parent=47 // pred_check_branch
              %346 = sbr.rel target = $region63
            $region62: #{tpu_custom_call.1} parent=47 // pred_region
              _
            $region63: #{tpu_custom_call.1} parent=47 // pred_fallthru
              _
          $region48: #{tpu_custom_call.1} parent=43 // pred_fallthru
            _
          %347 = vnop
        $region44: #{tpu_custom_call.1} parent=39 // pred_fallthru
          _
        // Predicated region
        $region64: #{tpu_custom_call.1} parent=39 // pred_check
          %p348 = pneg %p84
        $region65: #{tpu_custom_call.1} parent=39 // pred_check_branch
          %350 = sbr.rel (%p348) target = $region67
        $region66: #{tpu_custom_call.1} parent=39 // pred_region
          %s351 = smul.u32 %s25, 3
          %s352 = sadd.s32 %s351, %s26
          %s353 = smul.u32 4, %s352
          %p354 = scmp.lt.s32.totalorder %s353, 23
          %s355 = scalar_select %p354, %s353, 23
          %s356 = smul.addr %s355, 4
          %s357 = scalar_lea.vmem %s1, %s356
          %s358 = smul.u32 %s25, 3
          %s359 = sadd.s32 %s358, %s26
          %s360 = smul.u32 4, %s359
        $region67: #{tpu_custom_call.1} parent=39 // pred_fallthru
          _
        // Predicated region
        $region68: #{tpu_custom_call.1} parent=39 // pred_check
          %p361 = pneg %p114
        $region69: #{tpu_custom_call.1} parent=39 // pred_check_branch
          %363 = sbr.rel (%p361) target = $region71
        $region70: #{tpu_custom_call.1} parent=39 // pred_region
          %s364 = smul.u32 %s25, 3
          %s365 = sadd.s32 %s364, %s26
          %s366 = smul.u32 4, %s365
          %p367 = scmp.lt.s32.totalorder %s366, 23
          %s368 = scalar_select %p367, %s366, 23
          %s369 = scalar_lea.vmem %s2, %s368
          %s370 = smul.u32 %s25, 3
          %s371 = sadd.s32 %s370, %s26
          %s372 = smul.u32 4, %s371
        $region71: #{tpu_custom_call.1} parent=39 // pred_fallthru
          _
      $region40: #{tpu_custom_call.1} parent=5 // pred_fallthru
        _
      %p373 = scmp.le.s32.totalorder 1, %s18
      %p374 = scmp.lt.s32.totalorder %s18, 7
      %p375 = pnand %p373, %p374
      %p376 = pneg %p375
      // Predicated region
      $region72: #{tpu_custom_call.1} parent=5 // pred_check
        _
      $region73: #{tpu_custom_call.1} parent=5 // pred_check_branch
        %378 = sbr.rel (%p375) target = $region75
      $region74: #{tpu_custom_call.1} parent=5 // pred_region
        %s379 = ssub.s32 %s18, 1
        %s380 = sand.u32 %s47, 1
        %s381 = sand.u32 %s47, 1
        %s382 = smul.addr %s381, 48
        %s383 = scalar_lea.vmem [#allocation3], %s382
        // Predicated region
        $region76: #{tpu_custom_call.1} parent=74 // pred_check
          %p384 = pneg %p60
        $region77: #{tpu_custom_call.1} parent=74 // pred_check_branch
          %386 = sbr.rel (%p384) target = $region79
        $region78: #{tpu_custom_call.1} parent=74 // pred_region
          _
        $region79: #{tpu_custom_call.1} parent=74 // pred_fallthru
          _
        %s387 = sand.u32 %s47, 1
        %s388 = sand.u32 %s47, 1
        %s389 = smul.addr %s388, 48
        %s390 = scalar_lea.vmem [#allocation3], %s389
        %p391 = pneg %p60
        %p392 = pneg %p57
        %s393 = smul.u32 %s27, 3
        %s394 = sadd.s32 %s393, %s28
        %s395 = smul.u32 4, %s394
        %p396 = scmp.lt.s32.totalorder %s395, 23
        %s397 = scalar_select %p396, %s395, 23
        %s398 = smul.addr %s397, 4
        %s399 = scalar_lea.vmem %s1, %s398
        %p400 = pneg %p90
        %p401 = pneg %p87
        %s402 = smul.u32 %s27, 3
        %s403 = sadd.s32 %s402, %s28
        %s404 = smul.u32 4, %s403
        %p405 = scmp.lt.s32.totalorder %s404, 23
        %s406 = scalar_select %p405, %s404, 23
        %s407 = scalar_lea.vmem %s2, %s406
        %p408 = pneg %p120
        %p409 = pneg %p117
        %p410 = pneg %p141
        %p411 = pneg %p138
        %p412 = pneg %p162
        %p413 = pneg %p159
        %p414 = pneg %p183
        %p415 = pneg %p180
        %p416 = pneg %p204
        %p417 = pneg %p201
        %p418 = pneg %p225
        %p419 = pneg %p222
        %p420 = pneg %p246
        %p421 = pneg %p243
        %p422 = pneg %p272
        %p423 = pneg %p269
        %s424 = sand.u32 %s259, 1
        %s425 = scalar_lea.sflag [#allocation5], %s424
        %s426 = sand.u32 %s259, 1
        %s427 = smul.addr %s426, 2
        %s428 = scalar_lea.vmem [#allocation4], %s427
        %s429 = smul.u32 %s27, 3
        %s430 = sadd.s32 %s429, %s28
        %s431 = smul.u32 4, %s430
        %s432 = smul.u32 %s27, 3
        %s433 = sadd.s32 %s432, %s28
        %s434 = smul.u32 4, %s433
        %p435 = scmp.lt.s32.totalorder %s434, 23
        %s436 = scalar_select %p435, %s434, 23
        %s437 = smul.addr %s436, 4
        %s438 = scalar_lea.vmem %s1, %s437
        %s439 = smul.u32 %s27, 3
        %s440 = sadd.s32 %s439, %s28
        %s441 = smul.u32 4, %s440
        %s442 = smul.u32 %s27, 3
        %s443 = sadd.s32 %s442, %s28
        %s444 = smul.u32 4, %s443
        %p445 = scmp.lt.s32.totalorder %s444, 23
        %s446 = scalar_select %p445, %s444, 23
        %s447 = scalar_lea.vmem %s2, %s446
        %s448 = smul.u32 %s27, 3
        %s449 = sadd.s32 %s448, %s28
        %s450 = smul.u32 4, %s449
        %p452 = scmp.eq.s32.totalorder %s28, 0
        // Predicated region
        $region80: #{tpu_custom_call.1} parent=74 // pred_check
          %p453 = pneg %p452
        $region81: #{tpu_custom_call.1} parent=74 // pred_check_branch
          %455 = sbr.rel (%p453) target = $region83
        $region82: #{tpu_custom_call.1} parent=74 // pred_region
          %vm456 = vcmask 254976
          %457 = vst.msk [vmem:[#allocation2] sm:$0x3] %vm456, 0.0
        $region83: #{tpu_custom_call.1} parent=74 // pred_fallthru
          _
        %v458 = vld [vmem:[%s3] sm:$0xf]
        %v459 = vld [vmem:[%s3 + $0x4] sm:$0xf]
        %v460 = vld [vmem:[%s3 + $0x8] sm:$0xf]
        %v461 = vld [vmem:[%s3 + $0xc] sm:$0xf]
        %v462 = vld [vmem:[%s5] sm:$0xf]
        %v463 = vld [vmem:[%s5 + $0x4] sm:$0xf]
        %v464 = vld [vmem:[%s5 + $0x8] sm:$0xf]
        %v465 = vld [vmem:[%s5 + $0xc] sm:$0xf]
        %v466 = vld [vmem:[%s7] sm:$0xf]
        %v467 = vld [vmem:[%s7 + $0x4] sm:$0xf]
        %v468 = vld [vmem:[%s7 + $0x8] sm:$0xf]
        %v469 = vld [vmem:[%s7 + $0xc] sm:$0xf]
        %v470 = vld [vmem:[%s4] sm:$0xff]
        %v471 = vld [vmem:[%s4 + $0x8] sm:$0xff]
        %v472 = vld [vmem:[%s4 + $0x10] sm:$0xff]
        %v473 = vld [vmem:[%s4 + $0x18] sm:$0xff]
        %v474 = vld [vmem:[%s6] sm:$0xff]
        %v475 = vld [vmem:[%s6 + $0x8] sm:$0xff]
        %v476 = vld [vmem:[%s6 + $0x10] sm:$0xff]
        %v477 = vld [vmem:[%s6 + $0x18] sm:$0xff]
        %v478 = vld [vmem:[%s8] sm:$0xff]
        %v479 = vld [vmem:[%s8 + $0x8] sm:$0xff]
        %v480 = vld [vmem:[%s8 + $0x10] sm:$0xff]
        %v481 = vld [vmem:[%s8 + $0x18] sm:$0xff]
        %v482 = vld [vmem:[%s383] sm:$0x77]
        %v483 = vld [vmem:[%s383 + $0x8] sm:$0x77]
        %485 = vset.pattern.permute.xlu0 0
        %486 = vperm.xlu0 %485, %v470
        %v487 = vpop.permute.xlu0 %486
        %490 = vset.pattern.permute.xlu0 0
        %491 = vperm.xlu0 %490, %v471
        %v492 = vpop.permute.xlu0 %491
        %495 = vset.pattern.permute.xlu0 0
        %496 = vperm.xlu0 %495, %v472
        %v497 = vpop.permute.xlu0 %496
        %500 = vset.pattern.permute.xlu0 0
        %501 = vperm.xlu0 %500, %v473
        %v502 = vpop.permute.xlu0 %501
        %v508 = vunpack.c.l.b16 %v458
        %v509 = vunpack.c.l.b16 %v459
        %v510 = vunpack.c.l.b16 %v460
        %v511 = vunpack.c.l.b16 %v461
        %v512 = vpack.c.b16 %v509, %v508
        %v513 = vpack.c.b16 %v511, %v510
        %v516 = vunpack.c.l.b16 %v482
        %v517 = vunpack.c.h.b16 %v482
        %v518 = vunpack.c.l.b16 %v483
        %v519 = vunpack.c.h.b16 %v483
        %v520 = vpack.c.b16 %v516, %v516
        %v521 = vpack.c.b16 %v517, %v517
        %v522 = vpack.c.b16 %v518, %v518
        %v523 = vpack.c.b16 %v519, %v519
        %vm524 = vcmask 39936
        %v526 = vsel %vm524, %v512, 0
        %v529 = vsel %vm524, %v513, 0
        %vm531 = vcmask 1041408
        %vm532 = vcmask 1042432
        %v533 = vsel %vm531, 4294967295, 65535
        %v534 = vsel %vm532, %v533, 0
        %v536 = vand.u32 %v520, %v534
        %v539 = vand.u32 %v521, %v534
        %v542 = vand.u32 %v522, %v534
        %v545 = vand.u32 %v523, %v534
        %547 = vmatprep.subr.bf16.mxu0 0
        %548 = vmatpush1.bf16.msra.mxu0 0
        %549 = vmatprep.subr.bf16.mxu0 0
        %550 = vmatpush1.bf16.msra.mxu0 0
        %551 = vmatprep.subr.bf16.mxu0 0
        %552 = vmatpush1.bf16.msra.mxu0 0
        %553 = vmatprep.subr.bf16.mxu0 0
        %554 = vmatpush1.bf16.msra.mxu0 0
        %555 = vmatprep.subr.bf16.mxu0 0
        %556 = vmatpush1.bf16.msra.mxu0 0
        %557 = vmatprep.subr.bf16.mxu0 0
        %558 = vmatpush1.bf16.msra.mxu0 0
        %559 = vmatprep.subr.bf16.mxu0 0
        %560 = vmatpush1.bf16.msra.mxu0 0
        %561 = vmatprep.subr.bf16.mxu0 %v539
        %562 = vmatpush1.bf16.msra.mxu0 %v536
        %563 = vmatprep.subr.bf16.mxu0 0
        %564 = vmatpush2.bf16.msra.mxu0 0
        %565 = vmatprep.subr.bf16.mxu0 0
        %566 = vmatpush2.bf16.msra.mxu0 0
        %567 = vmatprep.subr.bf16.mxu0 0
        %568 = vmatpush2.bf16.msra.mxu0 0
        %569 = vmatprep.subr.bf16.mxu0 0
        %570 = vmatpush2.bf16.msra.mxu0 0
        %571 = vmatprep.subr.bf16.mxu0 0
        %572 = vmatpush2.bf16.msra.mxu0 0
        %573 = vmatprep.subr.bf16.mxu0 0
        %574 = vmatpush2.bf16.msra.mxu0 0
        %575 = vmatprep.subr.bf16.mxu0 0
        %576 = vmatpush2.bf16.msra.mxu0 0
        %577 = vmatprep.subr.bf16.mxu0 0
        %578 = vmatpush2.bf16.msra.mxu0 0
        %579 = vmatprep.mubr.bf16.mxu0 0
        %580 = vmatmul.mubr.bf16.gmra.mxu0 %v526
        %v581 = vpop.f32.mrf.mxu0
        %v582 = vadd.f32 %v487, %v581
        %v583 = vpop.f32.mrf.mxu0
        %v584 = vadd.f32 %v487, %v583
        %v585 = vpop.f32.mrf.mxu0
        %v586 = vadd.f32 %v492, %v585
        %v587 = vpop.f32.mrf.mxu0
        %v588 = vadd.f32 %v492, %v587
        %589 = vmatprep.mubr.bf16.mxu0 0
        %590 = vmatmul.mubr.bf16.gmra.mxu0 %v529
        %v591 = vpop.f32.mrf.mxu0
        %v592 = vadd.f32 %v497, %v591
        %v593 = vpop.f32.mrf.mxu0
        %v594 = vadd.f32 %v497, %v593
        %v595 = vpop.f32.mrf.mxu0
        %v596 = vadd.f32 %v502, %v595
        %v597 = vpop.f32.mrf.mxu0
        %v598 = vadd.f32 %v502, %v597
        %599 = vdwg.mxu0
        %600 = vmatprep.subr.bf16.mxu0 0
        %601 = vmatpush1.bf16.msra.mxu0 0
        %602 = vmatprep.subr.bf16.mxu0 0
        %603 = vmatpush1.bf16.msra.mxu0 0
        %604 = vmatprep.subr.bf16.mxu0 0
        %605 = vmatpush1.bf16.msra.mxu0 0
        %606 = vmatprep.subr.bf16.mxu0 0
        %607 = vmatpush1.bf16.msra.mxu0 0
        %608 = vmatprep.subr.bf16.mxu0 0
        %609 = vmatpush1.bf16.msra.mxu0 0
        %610 = vmatprep.subr.bf16.mxu0 0
        %611 = vmatpush1.bf16.msra.mxu0 0
        %612 = vmatprep.subr.bf16.mxu0 0
        %613 = vmatpush1.bf16.msra.mxu0 0
        %614 = vmatprep.subr.bf16.mxu0 %v545
        %615 = vmatpush1.bf16.msra.mxu0 %v542
        %616 = vmatprep.subr.bf16.mxu0 0
        %617 = vmatpush2.bf16.msra.mxu0 0
        %618 = vmatprep.subr.bf16.mxu0 0
        %619 = vmatpush2.bf16.msra.mxu0 0
        %620 = vmatprep.subr.bf16.mxu0 0
        %621 = vmatpush2.bf16.msra.mxu0 0
        %622 = vmatprep.subr.bf16.mxu0 0
        %623 = vmatpush2.bf16.msra.mxu0 0
        %624 = vmatprep.subr.bf16.mxu0 0
        %625 = vmatpush2.bf16.msra.mxu0 0
        %626 = vmatprep.subr.bf16.mxu0 0
        %627 = vmatpush2.bf16.msra.mxu0 0
        %628 = vmatprep.subr.bf16.mxu0 0
        %629 = vmatpush2.bf16.msra.mxu0 0
        %630 = vmatprep.subr.bf16.mxu0 0
        %631 = vmatpush2.bf16.msra.mxu0 0
        %632 = vmatprep.mubr.bf16.mxu0 0
        %633 = vmatmul.mubr.bf16.gmra.mxu0 %v526
        %v634 = vpop.f32.mrf.mxu0
        %v635 = vadd.f32 %v487, %v634
        %v636 = vpop.f32.mrf.mxu0
        %v637 = vadd.f32 %v487, %v636
        %v638 = vpop.f32.mrf.mxu0
        %v639 = vadd.f32 %v492, %v638
        %v640 = vpop.f32.mrf.mxu0
        %v641 = vadd.f32 %v492, %v640
        %642 = vmatprep.mubr.bf16.mxu0 0
        %643 = vmatmul.mubr.bf16.gmra.mxu0 %v529
        %v644 = vpop.f32.mrf.mxu0
        %v645 = vadd.f32 %v497, %v644
        %v646 = vpop.f32.mrf.mxu0
        %v647 = vadd.f32 %v497, %v646
        %v648 = vpop.f32.mrf.mxu0
        %v649 = vadd.f32 %v502, %v648
        %v650 = vpop.f32.mrf.mxu0
        %v651 = vadd.f32 %v502, %v650
        %652 = vdwg.mxu0
        %v653 = vmax.f32 %v582, 0.0
        %v654 = vmax.f32 %v584, 0.0
        %v655 = vmax.f32 %v635, 0.0
        %v656 = vmax.f32 %v637, 0.0
        %v657 = vmax.f32 %v586, 0.0
        %v658 = vmax.f32 %v588, 0.0
        %v659 = vmax.f32 %v639, 0.0
        %v660 = vmax.f32 %v641, 0.0
        %v661 = vmax.f32 %v592, 0.0
        %v662 = vmax.f32 %v594, 0.0
        %v663 = vmax.f32 %v645, 0.0
        %v664 = vmax.f32 %v647, 0.0
        %v665 = vmax.f32 %v596, 0.0
        %v666 = vmax.f32 %v598, 0.0
        %v667 = vmax.f32 %v649, 0.0
        %v668 = vmax.f32 %v651, 0.0
        %v669 = vpack.c.bf16 %v657, %v653
        %v670 = vpack.c.bf16 %v658, %v654
        %v671 = vpack.c.bf16 %v659, %v655
        %v672 = vpack.c.bf16 %v660, %v656
        %v673 = vpack.c.bf16 %v665, %v661
        %v674 = vpack.c.bf16 %v666, %v662
        %v675 = vpack.c.bf16 %v667, %v663
        %v676 = vpack.c.bf16 %v668, %v664
        %678 = vset.pattern.permute.xlu0 0
        %679 = vperm.xlu0 %678, %v474
        %v680 = vpop.permute.xlu0 %679
        %683 = vset.pattern.permute.xlu0 0
        %684 = vperm.xlu0 %683, %v475
        %v685 = vpop.permute.xlu0 %684
        %688 = vset.pattern.permute.xlu0 0
        %689 = vperm.xlu0 %688, %v476
        %v690 = vpop.permute.xlu0 %689
        %693 = vset.pattern.permute.xlu0 0
        %694 = vperm.xlu0 %693, %v477
        %v695 = vpop.permute.xlu0 %694
        %v701 = vunpack.c.l.b16 %v462
        %v702 = vunpack.c.l.b16 %v463
        %v703 = vunpack.c.l.b16 %v464
        %v704 = vunpack.c.l.b16 %v465
        %v705 = vpack.c.b16 %v702, %v701
        %v706 = vpack.c.b16 %v704, %v703
        %vm707 = vcmask 261120
        %v709 = vsel %vm707, %v705, 0
        %v712 = vsel %vm707, %v706, 0
        %714 = vmatprep.subr.bf16.mxu0 0
        %715 = vmatpush1.bf16.msra.mxu0 0
        %716 = vmatprep.subr.bf16.mxu0 0
        %717 = vmatpush1.bf16.msra.mxu0 0
        %718 = vmatprep.subr.bf16.mxu0 0
        %719 = vmatpush1.bf16.msra.mxu0 0
        %720 = vmatprep.subr.bf16.mxu0 0
        %721 = vmatpush1.bf16.msra.mxu0 0
        %722 = vmatprep.subr.bf16.mxu0 0
        %723 = vmatpush1.bf16.msra.mxu0 0
        %724 = vmatprep.subr.bf16.mxu0 0
        %725 = vmatpush1.bf16.msra.mxu0 0
        %726 = vmatprep.subr.bf16.mxu0 %v674
        %727 = vmatpush1.bf16.msra.mxu0 %v673
        %728 = vmatprep.subr.bf16.mxu0 %v670
        %729 = vmatpush1.bf16.msra.mxu0 %v669
        %730 = vmatprep.subr.bf16.mxu0 0
        %731 = vmatpush2.bf16.msra.mxu0 0
        %732 = vmatprep.subr.bf16.mxu0 0
        %733 = vmatpush2.bf16.msra.mxu0 0
        %734 = vmatprep.subr.bf16.mxu0 0
        %735 = vmatpush2.bf16.msra.mxu0 0
        %736 = vmatprep.subr.bf16.mxu0 0
        %737 = vmatpush2.bf16.msra.mxu0 0
        %738 = vmatprep.subr.bf16.mxu0 0
        %739 = vmatpush2.bf16.msra.mxu0 0
        %740 = vmatprep.subr.bf16.mxu0 0
        %741 = vmatpush2.bf16.msra.mxu0 0
        %742 = vmatprep.subr.bf16.mxu0 0
        %743 = vmatpush2.bf16.msra.mxu0 0
        %744 = vmatprep.subr.bf16.mxu0 0
        %745 = vmatpush2.bf16.msra.mxu0 0
        %746 = vmatprep.mubr.bf16.mxu0 0
        %747 = vmatmul.mubr.bf16.gmra.mxu0 %v709
        %v748 = vpop.f32.mrf.mxu0
        %v749 = vadd.f32 %v680, %v748
        %v750 = vpop.f32.mrf.mxu0
        %v751 = vadd.f32 %v680, %v750
        %v752 = vpop.f32.mrf.mxu0
        %v753 = vadd.f32 %v685, %v752
        %v754 = vpop.f32.mrf.mxu0
        %v755 = vadd.f32 %v685, %v754
        %756 = vmatprep.mubr.bf16.mxu0 0
        %757 = vmatmul.mubr.bf16.gmra.mxu0 %v712
        %v758 = vpop.f32.mrf.mxu0
        %v759 = vadd.f32 %v690, %v758
        %v760 = vpop.f32.mrf.mxu0
        %v761 = vadd.f32 %v690, %v760
        %v762 = vpop.f32.mrf.mxu0
        %v763 = vadd.f32 %v695, %v762
        %v764 = vpop.f32.mrf.mxu0
        %v765 = vadd.f32 %v695, %v764
        %766 = vdwg.mxu0
        %767 = vmatprep.subr.bf16.mxu0 0
        %768 = vmatpush1.bf16.msra.mxu0 0
        %769 = vmatprep.subr.bf16.mxu0 0
        %770 = vmatpush1.bf16.msra.mxu0 0
        %771 = vmatprep.subr.bf16.mxu0 0
        %772 = vmatpush1.bf16.msra.mxu0 0
        %773 = vmatprep.subr.bf16.mxu0 0
        %774 = vmatpush1.bf16.msra.mxu0 0
        %775 = vmatprep.subr.bf16.mxu0 0
        %776 = vmatpush1.bf16.msra.mxu0 0
        %777 = vmatprep.subr.bf16.mxu0 0
        %778 = vmatpush1.bf16.msra.mxu0 0
        %779 = vmatprep.subr.bf16.mxu0 %v676
        %780 = vmatpush1.bf16.msra.mxu0 %v675
        %781 = vmatprep.subr.bf16.mxu0 %v672
        %782 = vmatpush1.bf16.msra.mxu0 %v671
        %783 = vmatprep.subr.bf16.mxu0 0
        %784 = vmatpush2.bf16.msra.mxu0 0
        %785 = vmatprep.subr.bf16.mxu0 0
        %786 = vmatpush2.bf16.msra.mxu0 0
        %787 = vmatprep.subr.bf16.mxu0 0
        %788 = vmatpush2.bf16.msra.mxu0 0
        %789 = vmatprep.subr.bf16.mxu0 0
        %790 = vmatpush2.bf16.msra.mxu0 0
        %791 = vmatprep.subr.bf16.mxu0 0
        %792 = vmatpush2.bf16.msra.mxu0 0
        %793 = vmatprep.subr.bf16.mxu0 0
        %794 = vmatpush2.bf16.msra.mxu0 0
        %795 = vmatprep.subr.bf16.mxu0 0
        %796 = vmatpush2.bf16.msra.mxu0 0
        %797 = vmatprep.subr.bf16.mxu0 0
        %798 = vmatpush2.bf16.msra.mxu0 0
        %799 = vmatprep.mubr.bf16.mxu0 0
        %800 = vmatmul.mubr.bf16.gmra.mxu0 %v709
        %v801 = vpop.f32.mrf.mxu0
        %v802 = vadd.f32 %v680, %v801
        %v803 = vpop.f32.mrf.mxu0
        %v804 = vadd.f32 %v680, %v803
        %v805 = vpop.f32.mrf.mxu0
        %v806 = vadd.f32 %v685, %v805
        %v807 = vpop.f32.mrf.mxu0
        %v808 = vadd.f32 %v685, %v807
        %809 = vmatprep.mubr.bf16.mxu0 0
        %810 = vmatmul.mubr.bf16.gmra.mxu0 %v712
        %v811 = vpop.f32.mrf.mxu0
        %v812 = vadd.f32 %v690, %v811
        %v813 = vpop.f32.mrf.mxu0
        %v814 = vadd.f32 %v690, %v813
        %v815 = vpop.f32.mrf.mxu0
        %v816 = vadd.f32 %v695, %v815
        %v817 = vpop.f32.mrf.mxu0
        %v818 = vadd.f32 %v695, %v817
        %819 = vdwg.mxu0
        %v820 = vmax.f32 %v749, 0.0
        %v821 = vmax.f32 %v751, 0.0
        %v822 = vmax.f32 %v802, 0.0
        %v823 = vmax.f32 %v804, 0.0
        %v824 = vmax.f32 %v753, 0.0
        %v825 = vmax.f32 %v755, 0.0
        %v826 = vmax.f32 %v806, 0.0
        %v827 = vmax.f32 %v808, 0.0
        %v828 = vmax.f32 %v759, 0.0
        %v829 = vmax.f32 %v761, 0.0
        %v830 = vmax.f32 %v812, 0.0
        %v831 = vmax.f32 %v814, 0.0
        %v832 = vmax.f32 %v763, 0.0
        %v833 = vmax.f32 %v765, 0.0
        %v834 = vmax.f32 %v816, 0.0
        %v835 = vmax.f32 %v818, 0.0
        %v836 = vld [vmem:[%s438] ss:$4 sm:$0xf]
        %v838 = vlaneseq
        %v839 = vshrl.u32 %v838, 7
        %v840 = vsub.s32 0, %v839
        %v841 = vrot.slane %v836, %v840
        %v842 = vlaneseq
        %v843 = vshrl.u32 %v842, 7
        %v844 = vsub.s32 1, %v843
        %v845 = vrot.slane %v836, %v844
        %v846 = vlaneseq
        %v847 = vshrl.u32 %v846, 7
        %v848 = vsub.s32 2, %v847
        %v849 = vrot.slane %v836, %v848
        %v850 = vlaneseq
        %v851 = vshrl.u32 %v850, 7
        %v852 = vsub.s32 3, %v851
        %v853 = vrot.slane %v836, %v852
        %v858 = vmul.f32 %v820, %v841
        %v859 = vmul.f32 %v821, %v845
        %v860 = vmul.f32 %v822, %v849
        %v861 = vmul.f32 %v823, %v853
        %v862 = vmul.f32 %v824, %v841
        %v863 = vmul.f32 %v825, %v845
        %v864 = vmul.f32 %v826, %v849
        %v865 = vmul.f32 %v827, %v853
        %v866 = vmul.f32 %v828, %v841
        %v867 = vmul.f32 %v829, %v845
        %v868 = vmul.f32 %v830, %v849
        %v869 = vmul.f32 %v831, %v853
        %v870 = vmul.f32 %v832, %v841
        %v871 = vmul.f32 %v833, %v845
        %v872 = vmul.f32 %v834, %v849
        %v873 = vmul.f32 %v835, %v853
        %v874 = vmax.f32 %v858, 0.0
        %v875 = vmax.f32 %v859, 0.0
        %v876 = vmax.f32 %v860, 0.0
        %v877 = vmax.f32 %v861, 0.0
        %v878 = vmax.f32 %v862, 0.0
        %v879 = vmax.f32 %v863, 0.0
        %v880 = vmax.f32 %v864, 0.0
        %v881 = vmax.f32 %v865, 0.0
        %v882 = vmax.f32 %v866, 0.0
        %v883 = vmax.f32 %v867, 0.0
        %v884 = vmax.f32 %v868, 0.0
        %v885 = vmax.f32 %v869, 0.0
        %v886 = vmax.f32 %v870, 0.0
        %v887 = vmax.f32 %v871, 0.0
        %v888 = vmax.f32 %v872, 0.0
        %v889 = vmax.f32 %v873, 0.0
        %s890 = scalar_lea.vmem %s383, 16 [#allocation3]
        %v891 = vld [vmem:[%s890] sm:$0x77]
        %v892 = vld [vmem:[%s890 + $0x8] sm:$0x77]
        %v895 = vunpack.c.l.b16 %v891
        %v896 = vunpack.c.h.b16 %v891
        %v897 = vunpack.c.l.b16 %v892
        %v898 = vunpack.c.h.b16 %v892
        %v899 = vpack.c.b16 %v895, %v895
        %v900 = vpack.c.b16 %v896, %v896
        %v901 = vpack.c.b16 %v897, %v897
        %v902 = vpack.c.b16 %v898, %v898
        %v904 = vand.u32 %v899, %v534
        %v907 = vand.u32 %v900, %v534
        %v910 = vand.u32 %v901, %v534
        %v913 = vand.u32 %v902, %v534
        %915 = vmatprep.subr.bf16.mxu0 0
        %916 = vmatpush1.bf16.msra.mxu0 0
        %917 = vmatprep.subr.bf16.mxu0 0
        %918 = vmatpush1.bf16.msra.mxu0 0
        %919 = vmatprep.subr.bf16.mxu0 0
        %920 = vmatpush1.bf16.msra.mxu0 0
        %921 = vmatprep.subr.bf16.mxu0 0
        %922 = vmatpush1.bf16.msra.mxu0 0
        %923 = vmatprep.subr.bf16.mxu0 0
        %924 = vmatpush1.bf16.msra.mxu0 0
        %925 = vmatprep.subr.bf16.mxu0 0
        %926 = vmatpush1.bf16.msra.mxu0 0
        %927 = vmatprep.subr.bf16.mxu0 0
        %928 = vmatpush1.bf16.msra.mxu0 0
        %929 = vmatprep.subr.bf16.mxu0 %v907
        %930 = vmatpush1.bf16.msra.mxu0 %v904
        %931 = vmatprep.subr.bf16.mxu0 0
        %932 = vmatpush2.bf16.msra.mxu0 0
        %933 = vmatprep.subr.bf16.mxu0 0
        %934 = vmatpush2.bf16.msra.mxu0 0
        %935 = vmatprep.subr.bf16.mxu0 0
        %936 = vmatpush2.bf16.msra.mxu0 0
        %937 = vmatprep.subr.bf16.mxu0 0
        %938 = vmatpush2.bf16.msra.mxu0 0
        %939 = vmatprep.subr.bf16.mxu0 0
        %940 = vmatpush2.bf16.msra.mxu0 0
        %941 = vmatprep.subr.bf16.mxu0 0
        %942 = vmatpush2.bf16.msra.mxu0 0
        %943 = vmatprep.subr.bf16.mxu0 0
        %944 = vmatpush2.bf16.msra.mxu0 0
        %945 = vmatprep.subr.bf16.mxu0 0
        %946 = vmatpush2.bf16.msra.mxu0 0
        %947 = vmatprep.mubr.bf16.mxu0 0
        %948 = vmatmul.mubr.bf16.gmra.mxu0 %v526
        %v949 = vpop.f32.mrf.mxu0
        %v950 = vadd.f32 %v487, %v949
        %v951 = vpop.f32.mrf.mxu0
        %v952 = vadd.f32 %v487, %v951
        %v953 = vpop.f32.mrf.mxu0
        %v954 = vadd.f32 %v492, %v953
        %v955 = vpop.f32.mrf.mxu0
        %v956 = vadd.f32 %v492, %v955
        %957 = vmatprep.mubr.bf16.mxu0 0
        %958 = vmatmul.mubr.bf16.gmra.mxu0 %v529
        %v959 = vpop.f32.mrf.mxu0
        %v960 = vadd.f32 %v497, %v959
        %v961 = vpop.f32.mrf.mxu0
        %v962 = vadd.f32 %v497, %v961
        %v963 = vpop.f32.mrf.mxu0
        %v964 = vadd.f32 %v502, %v963
        %v965 = vpop.f32.mrf.mxu0
        %v966 = vadd.f32 %v502, %v965
        %967 = vdwg.mxu0
        %968 = vmatprep.subr.bf16.mxu0 0
        %969 = vmatpush1.bf16.msra.mxu0 0
        %970 = vmatprep.subr.bf16.mxu0 0
        %971 = vmatpush1.bf16.msra.mxu0 0
        %972 = vmatprep.subr.bf16.mxu0 0
        %973 = vmatpush1.bf16.msra.mxu0 0
        %974 = vmatprep.subr.bf16.mxu0 0
        %975 = vmatpush1.bf16.msra.mxu0 0
        %976 = vmatprep.subr.bf16.mxu0 0
        %977 = vmatpush1.bf16.msra.mxu0 0
        %978 = vmatprep.subr.bf16.mxu0 0
        %979 = vmatpush1.bf16.msra.mxu0 0
        %980 = vmatprep.subr.bf16.mxu0 0
        %981 = vmatpush1.bf16.msra.mxu0 0
        %982 = vmatprep.subr.bf16.mxu0 %v913
        %983 = vmatpush1.bf16.msra.mxu0 %v910
        %984 = vmatprep.subr.bf16.mxu0 0
        %985 = vmatpush2.bf16.msra.mxu0 0
        %986 = vmatprep.subr.bf16.mxu0 0
        %987 = vmatpush2.bf16.msra.mxu0 0
        %988 = vmatprep.subr.bf16.mxu0 0
        %989 = vmatpush2.bf16.msra.mxu0 0
        %990 = vmatprep.subr.bf16.mxu0 0
        %991 = vmatpush2.bf16.msra.mxu0 0
        %992 = vmatprep.subr.bf16.mxu0 0
        %993 = vmatpush2.bf16.msra.mxu0 0
        %994 = vmatprep.subr.bf16.mxu0 0
        %995 = vmatpush2.bf16.msra.mxu0 0
        %996 = vmatprep.subr.bf16.mxu0 0
        %997 = vmatpush2.bf16.msra.mxu0 0
        %998 = vmatprep.subr.bf16.mxu0 0
        %999 = vmatpush2.bf16.msra.mxu0 0
        %1000 = vmatprep.mubr.bf16.mxu0 0
        %1001 = vmatmul.mubr.bf16.gmra.mxu0 %v526
        %v1002 = vpop.f32.mrf.mxu0
        %v1003 = vadd.f32 %v487, %v1002
        %v1004 = vpop.f32.mrf.mxu0
        %v1005 = vadd.f32 %v487, %v1004
        %v1006 = vpop.f32.mrf.mxu0
        %v1007 = vadd.f32 %v492, %v1006
        %v1008 = vpop.f32.mrf.mxu0
        %v1009 = vadd.f32 %v492, %v1008
        %1010 = vmatprep.mubr.bf16.mxu0 0
        %1011 = vmatmul.mubr.bf16.gmra.mxu0 %v529
        %v1012 = vpop.f32.mrf.mxu0
        %v1013 = vadd.f32 %v497, %v1012
        %v1014 = vpop.f32.mrf.mxu0
        %v1015 = vadd.f32 %v497, %v1014
        %v1016 = vpop.f32.mrf.mxu0
        %v1017 = vadd.f32 %v502, %v1016
        %v1018 = vpop.f32.mrf.mxu0
        %v1019 = vadd.f32 %v502, %v1018
        %1020 = vdwg.mxu0
        %v1021 = vmax.f32 %v950, 0.0
        %v1022 = vmax.f32 %v952, 0.0
        %v1023 = vmax.f32 %v1003, 0.0
        %v1024 = vmax.f32 %v1005, 0.0
        %v1025 = vmax.f32 %v954, 0.0
        %v1026 = vmax.f32 %v956, 0.0
        %v1027 = vmax.f32 %v1007, 0.0
        %v1028 = vmax.f32 %v1009, 0.0
        %v1029 = vmax.f32 %v960, 0.0
        %v1030 = vmax.f32 %v962, 0.0
        %v1031 = vmax.f32 %v1013, 0.0
        %v1032 = vmax.f32 %v1015, 0.0
        %v1033 = vmax.f32 %v964, 0.0
        %v1034 = vmax.f32 %v966, 0.0
        %v1035 = vmax.f32 %v1017, 0.0
        %v1036 = vmax.f32 %v1019, 0.0
        %v1037 = vpack.c.bf16 %v1025, %v1021
        %v1038 = vpack.c.bf16 %v1026, %v1022
        %v1039 = vpack.c.bf16 %v1027, %v1023
        %v1040 = vpack.c.bf16 %v1028, %v1024
        %v1041 = vpack.c.bf16 %v1033, %v1029
        %v1042 = vpack.c.bf16 %v1034, %v1030
        %v1043 = vpack.c.bf16 %v1035, %v1031
        %v1044 = vpack.c.bf16 %v1036, %v1032
        %1045 = vmatprep.subr.bf16.mxu0 0
        %1046 = vmatpush1.bf16.msra.mxu0 0
        %1047 = vmatprep.subr.bf16.mxu0 0
        %1048 = vmatpush1.bf16.msra.mxu0 0
        %1049 = vmatprep.subr.bf16.mxu0 0
        %1050 = vmatpush1.bf16.msra.mxu0 0
        %1051 = vmatprep.subr.bf16.mxu0 0
        %1052 = vmatpush1.bf16.msra.mxu0 0
        %1053 = vmatprep.subr.bf16.mxu0 0
        %1054 = vmatpush1.bf16.msra.mxu0 0
        %1055 = vmatprep.subr.bf16.mxu0 0
        %1056 = vmatpush1.bf16.msra.mxu0 0
        %1057 = vmatprep.subr.bf16.mxu0 %v1042
        %1058 = vmatpush1.bf16.msra.mxu0 %v1041
        %1059 = vmatprep.subr.bf16.mxu0 %v1038
        %1060 = vmatpush1.bf16.msra.mxu0 %v1037
        %1061 = vmatprep.subr.bf16.mxu0 0
        %1062 = vmatpush2.bf16.msra.mxu0 0
        %1063 = vmatprep.subr.bf16.mxu0 0
        %1064 = vmatpush2.bf16.msra.mxu0 0
        %1065 = vmatprep.subr.bf16.mxu0 0
        %1066 = vmatpush2.bf16.msra.mxu0 0
        %1067 = vmatprep.subr.bf16.mxu0 0
        %1068 = vmatpush2.bf16.msra.mxu0 0
        %1069 = vmatprep.subr.bf16.mxu0 0
        %1070 = vmatpush2.bf16.msra.mxu0 0
        %1071 = vmatprep.subr.bf16.mxu0 0
        %1072 = vmatpush2.bf16.msra.mxu0 0
        %1073 = vmatprep.subr.bf16.mxu0 0
        %1074 = vmatpush2.bf16.msra.mxu0 0
        %1075 = vmatprep.subr.bf16.mxu0 0
        %1076 = vmatpush2.bf16.msra.mxu0 0
        %1077 = vmatprep.mubr.bf16.mxu0 0
        %1078 = vmatmul.mubr.bf16.gmra.mxu0 %v709
        %v1079 = vpop.f32.mrf.mxu0
        %v1080 = vadd.f32 %v680, %v1079
        %v1081 = vpop.f32.mrf.mxu0
        %v1082 = vadd.f32 %v680, %v1081
        %v1083 = vpop.f32.mrf.mxu0
        %v1084 = vadd.f32 %v685, %v1083
        %v1085 = vpop.f32.mrf.mxu0
        %v1086 = vadd.f32 %v685, %v1085
        %1087 = vmatprep.mubr.bf16.mxu0 0
        %1088 = vmatmul.mubr.bf16.gmra.mxu0 %v712
        %v1089 = vpop.f32.mrf.mxu0
        %v1090 = vadd.f32 %v690, %v1089
        %v1091 = vpop.f32.mrf.mxu0
        %v1092 = vadd.f32 %v690, %v1091
        %v1093 = vpop.f32.mrf.mxu0
        %v1094 = vadd.f32 %v695, %v1093
        %v1095 = vpop.f32.mrf.mxu0
        %v1096 = vadd.f32 %v695, %v1095
        %1097 = vdwg.mxu0
        %1098 = vmatprep.subr.bf16.mxu0 0
        %1099 = vmatpush1.bf16.msra.mxu0 0
        %1100 = vmatprep.subr.bf16.mxu0 0
        %1101 = vmatpush1.bf16.msra.mxu0 0
        %1102 = vmatprep.subr.bf16.mxu0 0
        %1103 = vmatpush1.bf16.msra.mxu0 0
        %1104 = vmatprep.subr.bf16.mxu0 0
        %1105 = vmatpush1.bf16.msra.mxu0 0
        %1106 = vmatprep.subr.bf16.mxu0 0
        %1107 = vmatpush1.bf16.msra.mxu0 0
        %1108 = vmatprep.subr.bf16.mxu0 0
        %1109 = vmatpush1.bf16.msra.mxu0 0
        %1110 = vmatprep.subr.bf16.mxu0 %v1044
        %1111 = vmatpush1.bf16.msra.mxu0 %v1043
        %1112 = vmatprep.subr.bf16.mxu0 %v1040
        %1113 = vmatpush1.bf16.msra.mxu0 %v1039
        %1114 = vmatprep.subr.bf16.mxu0 0
        %1115 = vmatpush2.bf16.msra.mxu0 0
        %1116 = vmatprep.subr.bf16.mxu0 0
        %1117 = vmatpush2.bf16.msra.mxu0 0
        %1118 = vmatprep.subr.bf16.mxu0 0
        %1119 = vmatpush2.bf16.msra.mxu0 0
        %1120 = vmatprep.subr.bf16.mxu0 0
        %1121 = vmatpush2.bf16.msra.mxu0 0
        %1122 = vmatprep.subr.bf16.mxu0 0
        %1123 = vmatpush2.bf16.msra.mxu0 0
        %1124 = vmatprep.subr.bf16.mxu0 0
        %1125 = vmatpush2.bf16.msra.mxu0 0
        %1126 = vmatprep.subr.bf16.mxu0 0
        %1127 = vmatpush2.bf16.msra.mxu0 0
        %1128 = vmatprep.subr.bf16.mxu0 0
        %1129 = vmatpush2.bf16.msra.mxu0 0
        %1130 = vmatprep.mubr.bf16.mxu0 0
        %1131 = vmatmul.mubr.bf16.gmra.mxu0 %v709
        %v1132 = vpop.f32.mrf.mxu0
        %v1133 = vadd.f32 %v680, %v1132
        %v1134 = vpop.f32.mrf.mxu0
        %v1135 = vadd.f32 %v680, %v1134
        %v1136 = vpop.f32.mrf.mxu0
        %v1137 = vadd.f32 %v685, %v1136
        %v1138 = vpop.f32.mrf.mxu0
        %v1139 = vadd.f32 %v685, %v1138
        %1140 = vmatprep.mubr.bf16.mxu0 0
        %1141 = vmatmul.mubr.bf16.gmra.mxu0 %v712
        %v1142 = vpop.f32.mrf.mxu0
        %v1143 = vadd.f32 %v690, %v1142
        %v1144 = vpop.f32.mrf.mxu0
        %v1145 = vadd.f32 %v690, %v1144
        %v1146 = vpop.f32.mrf.mxu0
        %v1147 = vadd.f32 %v695, %v1146
        %v1148 = vpop.f32.mrf.mxu0
        %v1149 = vadd.f32 %v695, %v1148
        %1150 = vdwg.mxu0
        %v1151 = vmax.f32 %v1080, 0.0
        %v1152 = vmax.f32 %v1082, 0.0
        %v1153 = vmax.f32 %v1133, 0.0
        %v1154 = vmax.f32 %v1135, 0.0
        %v1155 = vmax.f32 %v1084, 0.0
        %v1156 = vmax.f32 %v1086, 0.0
        %v1157 = vmax.f32 %v1137, 0.0
        %v1158 = vmax.f32 %v1139, 0.0
        %v1159 = vmax.f32 %v1090, 0.0
        %v1160 = vmax.f32 %v1092, 0.0
        %v1161 = vmax.f32 %v1143, 0.0
        %v1162 = vmax.f32 %v1145, 0.0
        %v1163 = vmax.f32 %v1094, 0.0
        %v1164 = vmax.f32 %v1096, 0.0
        %v1165 = vmax.f32 %v1147, 0.0
        %v1166 = vmax.f32 %v1149, 0.0
        %s1167 = scalar_lea.vmem %s438, 1
        %v1168 = vld [vmem:[%s1167] ss:$4 sm:$0xf]
        %v1170 = vlaneseq
        %v1171 = vshrl.u32 %v1170, 7
        %v1172 = vsub.s32 0, %v1171
        %v1173 = vrot.slane %v1168, %v1172
        %v1174 = vlaneseq
        %v1175 = vshrl.u32 %v1174, 7
        %v1176 = vsub.s32 1, %v1175
        %v1177 = vrot.slane %v1168, %v1176
        %v1178 = vlaneseq
        %v1179 = vshrl.u32 %v1178, 7
        %v1180 = vsub.s32 2, %v1179
        %v1181 = vrot.slane %v1168, %v1180
        %v1182 = vlaneseq
        %v1183 = vshrl.u32 %v1182, 7
        %v1184 = vsub.s32 3, %v1183
        %v1185 = vrot.slane %v1168, %v1184
        %v1190 = vmul.f32 %v1151, %v1173
        %v1191 = vmul.f32 %v1152, %v1177
        %v1192 = vmul.f32 %v1153, %v1181
        %v1193 = vmul.f32 %v1154, %v1185
        %v1194 = vmul.f32 %v1155, %v1173
        %v1195 = vmul.f32 %v1156, %v1177
        %v1196 = vmul.f32 %v1157, %v1181
        %v1197 = vmul.f32 %v1158, %v1185
        %v1198 = vmul.f32 %v1159, %v1173
        %v1199 = vmul.f32 %v1160, %v1177
        %v1200 = vmul.f32 %v1161, %v1181
        %v1201 = vmul.f32 %v1162, %v1185
        %v1202 = vmul.f32 %v1163, %v1173
        %v1203 = vmul.f32 %v1164, %v1177
        %v1204 = vmul.f32 %v1165, %v1181
        %v1205 = vmul.f32 %v1166, %v1185
        %v1206 = vmax.f32 %v874, %v1190
        %v1207 = vmax.f32 %v875, %v1191
        %v1208 = vmax.f32 %v876, %v1192
        %v1209 = vmax.f32 %v877, %v1193
        %v1210 = vmax.f32 %v878, %v1194
        %v1211 = vmax.f32 %v879, %v1195
        %v1212 = vmax.f32 %v880, %v1196
        %v1213 = vmax.f32 %v881, %v1197
        %v1214 = vmax.f32 %v882, %v1198
        %v1215 = vmax.f32 %v883, %v1199
        %v1216 = vmax.f32 %v884, %v1200
        %v1217 = vmax.f32 %v885, %v1201
        %v1218 = vmax.f32 %v886, %v1202
        %v1219 = vmax.f32 %v887, %v1203
        %v1220 = vmax.f32 %v888, %v1204
        %v1221 = vmax.f32 %v889, %v1205
        %s1222 = scalar_lea.vmem %s383, 32 [#allocation3]
        %v1223 = vld [vmem:[%s1222] sm:$0x77]
        %v1224 = vld [vmem:[%s1222 + $0x8] sm:$0x77]
        %v1227 = vunpack.c.l.b16 %v1223
        %v1228 = vunpack.c.h.b16 %v1223
        %v1229 = vunpack.c.l.b16 %v1224
        %v1230 = vunpack.c.h.b16 %v1224
        %v1231 = vpack.c.b16 %v1227, %v1227
        %v1232 = vpack.c.b16 %v1228, %v1228
        %v1233 = vpack.c.b16 %v1229, %v1229
        %v1234 = vpack.c.b16 %v1230, %v1230
        %v1236 = vand.u32 %v1231, %v534
        %v1239 = vand.u32 %v1232, %v534
        %v1242 = vand.u32 %v1233, %v534
        %v1245 = vand.u32 %v1234, %v534
        %1247 = vmatprep.subr.bf16.mxu0 0
        %1248 = vmatpush1.bf16.msra.mxu0 0
        %1249 = vmatprep.subr.bf16.mxu0 0
        %1250 = vmatpush1.bf16.msra.mxu0 0
        %1251 = vmatprep.subr.bf16.mxu0 0
        %1252 = vmatpush1.bf16.msra.mxu0 0
        %1253 = vmatprep.subr.bf16.mxu0 0
        %1254 = vmatpush1.bf16.msra.mxu0 0
        %1255 = vmatprep.subr.bf16.mxu0 0
        %1256 = vmatpush1.bf16.msra.mxu0 0
        %1257 = vmatprep.subr.bf16.mxu0 0
        %1258 = vmatpush1.bf16.msra.mxu0 0
        %1259 = vmatprep.subr.bf16.mxu0 0
        %1260 = vmatpush1.bf16.msra.mxu0 0
        %1261 = vmatprep.subr.bf16.mxu0 %v1239
        %1262 = vmatpush1.bf16.msra.mxu0 %v1236
        %1263 = vmatprep.subr.bf16.mxu0 0
        %1264 = vmatpush2.bf16.msra.mxu0 0
        %1265 = vmatprep.subr.bf16.mxu0 0
        %1266 = vmatpush2.bf16.msra.mxu0 0
        %1267 = vmatprep.subr.bf16.mxu0 0
        %1268 = vmatpush2.bf16.msra.mxu0 0
        %1269 = vmatprep.subr.bf16.mxu0 0
        %1270 = vmatpush2.bf16.msra.mxu0 0
        %1271 = vmatprep.subr.bf16.mxu0 0
        %1272 = vmatpush2.bf16.msra.mxu0 0
        %1273 = vmatprep.subr.bf16.mxu0 0
        %1274 = vmatpush2.bf16.msra.mxu0 0
        %1275 = vmatprep.subr.bf16.mxu0 0
        %1276 = vmatpush2.bf16.msra.mxu0 0
        %1277 = vmatprep.subr.bf16.mxu0 0
        %1278 = vmatpush2.bf16.msra.mxu0 0
        %1279 = vmatprep.mubr.bf16.mxu0 0
        %1280 = vmatmul.mubr.bf16.gmra.mxu0 %v526
        %v1281 = vpop.f32.mrf.mxu0
        %v1282 = vadd.f32 %v487, %v1281
        %v1283 = vpop.f32.mrf.mxu0
        %v1284 = vadd.f32 %v487, %v1283
        %v1285 = vpop.f32.mrf.mxu0
        %v1286 = vadd.f32 %v492, %v1285
        %v1287 = vpop.f32.mrf.mxu0
        %v1288 = vadd.f32 %v492, %v1287
        %1289 = vmatprep.mubr.bf16.mxu0 0
        %1290 = vmatmul.mubr.bf16.gmra.mxu0 %v529
        %v1291 = vpop.f32.mrf.mxu0
        %v1292 = vadd.f32 %v497, %v1291
        %v1293 = vpop.f32.mrf.mxu0
        %v1294 = vadd.f32 %v497, %v1293
        %v1295 = vpop.f32.mrf.mxu0
        %v1296 = vadd.f32 %v502, %v1295
        %v1297 = vpop.f32.mrf.mxu0
        %v1298 = vadd.f32 %v502, %v1297
        %1299 = vdwg.mxu0
        %1300 = vmatprep.subr.bf16.mxu0 0
        %1301 = vmatpush1.bf16.msra.mxu0 0
        %1302 = vmatprep.subr.bf16.mxu0 0
        %1303 = vmatpush1.bf16.msra.mxu0 0
        %1304 = vmatprep.subr.bf16.mxu0 0
        %1305 = vmatpush1.bf16.msra.mxu0 0
        %1306 = vmatprep.subr.bf16.mxu0 0
        %1307 = vmatpush1.bf16.msra.mxu0 0
        %1308 = vmatprep.subr.bf16.mxu0 0
        %1309 = vmatpush1.bf16.msra.mxu0 0
        %1310 = vmatprep.subr.bf16.mxu0 0
        %1311 = vmatpush1.bf16.msra.mxu0 0
        %1312 = vmatprep.subr.bf16.mxu0 0
        %1313 = vmatpush1.bf16.msra.mxu0 0
        %1314 = vmatprep.subr.bf16.mxu0 %v1245
        %1315 = vmatpush1.bf16.msra.mxu0 %v1242
        %1316 = vmatprep.subr.bf16.mxu0 0
        %1317 = vmatpush2.bf16.msra.mxu0 0
        %1318 = vmatprep.subr.bf16.mxu0 0
        %1319 = vmatpush2.bf16.msra.mxu0 0
        %1320 = vmatprep.subr.bf16.mxu0 0
        %1321 = vmatpush2.bf16.msra.mxu0 0
        %1322 = vmatprep.subr.bf16.mxu0 0
        %1323 = vmatpush2.bf16.msra.mxu0 0
        %1324 = vmatprep.subr.bf16.mxu0 0
        %1325 = vmatpush2.bf16.msra.mxu0 0
        %1326 = vmatprep.subr.bf16.mxu0 0
        %1327 = vmatpush2.bf16.msra.mxu0 0
        %1328 = vmatprep.subr.bf16.mxu0 0
        %1329 = vmatpush2.bf16.msra.mxu0 0
        %1330 = vmatprep.subr.bf16.mxu0 0
        %1331 = vmatpush2.bf16.msra.mxu0 0
        %1332 = vmatprep.mubr.bf16.mxu0 0
        %1333 = vmatmul.mubr.bf16.gmra.mxu0 %v526
        %v1334 = vpop.f32.mrf.mxu0
        %v1335 = vadd.f32 %v487, %v1334
        %v1336 = vpop.f32.mrf.mxu0
        %v1337 = vadd.f32 %v487, %v1336
        %v1338 = vpop.f32.mrf.mxu0
        %v1339 = vadd.f32 %v492, %v1338
        %v1340 = vpop.f32.mrf.mxu0
        %v1341 = vadd.f32 %v492, %v1340
        %1342 = vmatprep.mubr.bf16.mxu0 0
        %1343 = vmatmul.mubr.bf16.gmra.mxu0 %v529
        %v1344 = vpop.f32.mrf.mxu0
        %v1345 = vadd.f32 %v497, %v1344
        %v1346 = vpop.f32.mrf.mxu0
        %v1347 = vadd.f32 %v497, %v1346
        %v1348 = vpop.f32.mrf.mxu0
        %v1349 = vadd.f32 %v502, %v1348
        %v1350 = vpop.f32.mrf.mxu0
        %v1351 = vadd.f32 %v502, %v1350
        %1352 = vdwg.mxu0
        %v1353 = vmax.f32 %v1282, 0.0
        %v1354 = vmax.f32 %v1284, 0.0
        %v1355 = vmax.f32 %v1335, 0.0
        %v1356 = vmax.f32 %v1337, 0.0
        %v1357 = vmax.f32 %v1286, 0.0
        %v1358 = vmax.f32 %v1288, 0.0
        %v1359 = vmax.f32 %v1339, 0.0
        %v1360 = vmax.f32 %v1341, 0.0
        %v1361 = vmax.f32 %v1292, 0.0
        %v1362 = vmax.f32 %v1294, 0.0
        %v1363 = vmax.f32 %v1345, 0.0
        %v1364 = vmax.f32 %v1347, 0.0
        %v1365 = vmax.f32 %v1296, 0.0
        %v1366 = vmax.f32 %v1298, 0.0
        %v1367 = vmax.f32 %v1349, 0.0
        %v1368 = vmax.f32 %v1351, 0.0
        %v1369 = vpack.c.bf16 %v1357, %v1353
        %v1370 = vpack.c.bf16 %v1358, %v1354
        %v1371 = vpack.c.bf16 %v1359, %v1355
        %v1372 = vpack.c.bf16 %v1360, %v1356
        %v1373 = vpack.c.bf16 %v1365, %v1361
        %v1374 = vpack.c.bf16 %v1366, %v1362
        %v1375 = vpack.c.bf16 %v1367, %v1363
        %v1376 = vpack.c.bf16 %v1368, %v1364
        %1377 = vmatprep.subr.bf16.mxu0 0
        %1378 = vmatpush1.bf16.msra.mxu0 0
        %1379 = vmatprep.subr.bf16.mxu0 0
        %1380 = vmatpush1.bf16.msra.mxu0 0
        %1381 = vmatprep.subr.bf16.mxu0 0
        %1382 = vmatpush1.bf16.msra.mxu0 0
        %1383 = vmatprep.subr.bf16.mxu0 0
        %1384 = vmatpush1.bf16.msra.mxu0 0
        %1385 = vmatprep.subr.bf16.mxu0 0
        %1386 = vmatpush1.bf16.msra.mxu0 0
        %1387 = vmatprep.subr.bf16.mxu0 0
        %1388 = vmatpush1.bf16.msra.mxu0 0
        %1389 = vmatprep.subr.bf16.mxu0 %v1374
        %1390 = vmatpush1.bf16.msra.mxu0 %v1373
        %1391 = vmatprep.subr.bf16.mxu0 %v1370
        %1392 = vmatpush1.bf16.msra.mxu0 %v1369
        %1393 = vmatprep.subr.bf16.mxu0 0
        %1394 = vmatpush2.bf16.msra.mxu0 0
        %1395 = vmatprep.subr.bf16.mxu0 0
        %1396 = vmatpush2.bf16.msra.mxu0 0
        %1397 = vmatprep.subr.bf16.mxu0 0
        %1398 = vmatpush2.bf16.msra.mxu0 0
        %1399 = vmatprep.subr.bf16.mxu0 0
        %1400 = vmatpush2.bf16.msra.mxu0 0
        %1401 = vmatprep.subr.bf16.mxu0 0
        %1402 = vmatpush2.bf16.msra.mxu0 0
        %1403 = vmatprep.subr.bf16.mxu0 0
        %1404 = vmatpush2.bf16.msra.mxu0 0
        %1405 = vmatprep.subr.bf16.mxu0 0
        %1406 = vmatpush2.bf16.msra.mxu0 0
        %1407 = vmatprep.subr.bf16.mxu0 0
        %1408 = vmatpush2.bf16.msra.mxu0 0
        %1409 = vmatprep.mubr.bf16.mxu0 0
        %1410 = vmatmul.mubr.bf16.gmra.mxu0 %v709
        %v1411 = vpop.f32.mrf.mxu0
        %v1412 = vadd.f32 %v680, %v1411
        %v1413 = vpop.f32.mrf.mxu0
        %v1414 = vadd.f32 %v680, %v1413
        %v1415 = vpop.f32.mrf.mxu0
        %v1416 = vadd.f32 %v685, %v1415
        %v1417 = vpop.f32.mrf.mxu0
        %v1418 = vadd.f32 %v685, %v1417
        %1419 = vmatprep.mubr.bf16.mxu0 0
        %1420 = vmatmul.mubr.bf16.gmra.mxu0 %v712
        %v1421 = vpop.f32.mrf.mxu0
        %v1422 = vadd.f32 %v690, %v1421
        %v1423 = vpop.f32.mrf.mxu0
        %v1424 = vadd.f32 %v690, %v1423
        %v1425 = vpop.f32.mrf.mxu0
        %v1426 = vadd.f32 %v695, %v1425
        %v1427 = vpop.f32.mrf.mxu0
        %v1428 = vadd.f32 %v695, %v1427
        %1429 = vdwg.mxu0
        %1430 = vmatprep.subr.bf16.mxu0 0
        %1431 = vmatpush1.bf16.msra.mxu0 0
        %1432 = vmatprep.subr.bf16.mxu0 0
        %1433 = vmatpush1.bf16.msra.mxu0 0
        %1434 = vmatprep.subr.bf16.mxu0 0
        %1435 = vmatpush1.bf16.msra.mxu0 0
        %1436 = vmatprep.subr.bf16.mxu0 0
        %1437 = vmatpush1.bf16.msra.mxu0 0
        %1438 = vmatprep.subr.bf16.mxu0 0
        %1439 = vmatpush1.bf16.msra.mxu0 0
        %1440 = vmatprep.subr.bf16.mxu0 0
        %1441 = vmatpush1.bf16.msra.mxu0 0
        %1442 = vmatprep.subr.bf16.mxu0 %v1376
        %1443 = vmatpush1.bf16.msra.mxu0 %v1375
        %1444 = vmatprep.subr.bf16.mxu0 %v1372
        %1445 = vmatpush1.bf16.msra.mxu0 %v1371
        %1446 = vmatprep.subr.bf16.mxu0 0
        %1447 = vmatpush2.bf16.msra.mxu0 0
        %1448 = vmatprep.subr.bf16.mxu0 0
        %1449 = vmatpush2.bf16.msra.mxu0 0
        %1450 = vmatprep.subr.bf16.mxu0 0
        %1451 = vmatpush2.bf16.msra.mxu0 0
        %1452 = vmatprep.subr.bf16.mxu0 0
        %1453 = vmatpush2.bf16.msra.mxu0 0
        %1454 = vmatprep.subr.bf16.mxu0 0
        %1455 = vmatpush2.bf16.msra.mxu0 0
        %1456 = vmatprep.subr.bf16.mxu0 0
        %1457 = vmatpush2.bf16.msra.mxu0 0
        %1458 = vmatprep.subr.bf16.mxu0 0
        %1459 = vmatpush2.bf16.msra.mxu0 0
        %1460 = vmatprep.subr.bf16.mxu0 0
        %1461 = vmatpush2.bf16.msra.mxu0 0
        %1462 = vmatprep.mubr.bf16.mxu0 0
        %1463 = vmatmul.mubr.bf16.gmra.mxu0 %v709
        %v1464 = vpop.f32.mrf.mxu0
        %v1465 = vadd.f32 %v680, %v1464
        %v1466 = vpop.f32.mrf.mxu0
        %v1467 = vadd.f32 %v680, %v1466
        %v1468 = vpop.f32.mrf.mxu0
        %v1469 = vadd.f32 %v685, %v1468
        %v1470 = vpop.f32.mrf.mxu0
        %v1471 = vadd.f32 %v685, %v1470
        %1472 = vmatprep.mubr.bf16.mxu0 0
        %1473 = vmatmul.mubr.bf16.gmra.mxu0 %v712
        %v1474 = vpop.f32.mrf.mxu0
        %v1475 = vadd.f32 %v690, %v1474
        %v1476 = vpop.f32.mrf.mxu0
        %v1477 = vadd.f32 %v690, %v1476
        %v1478 = vpop.f32.mrf.mxu0
        %v1479 = vadd.f32 %v695, %v1478
        %v1480 = vpop.f32.mrf.mxu0
        %v1481 = vadd.f32 %v695, %v1480
        %1482 = vdwg.mxu0
        %v1483 = vmax.f32 %v1412, 0.0
        %v1484 = vmax.f32 %v1414, 0.0
        %v1485 = vmax.f32 %v1465, 0.0
        %v1486 = vmax.f32 %v1467, 0.0
        %v1487 = vmax.f32 %v1416, 0.0
        %v1488 = vmax.f32 %v1418, 0.0
        %v1489 = vmax.f32 %v1469, 0.0
        %v1490 = vmax.f32 %v1471, 0.0
        %v1491 = vmax.f32 %v1422, 0.0
        %v1492 = vmax.f32 %v1424, 0.0
        %v1493 = vmax.f32 %v1475, 0.0
        %v1494 = vmax.f32 %v1477, 0.0
        %v1495 = vmax.f32 %v1426, 0.0
        %v1496 = vmax.f32 %v1428, 0.0
        %v1497 = vmax.f32 %v1479, 0.0
        %v1498 = vmax.f32 %v1481, 0.0
        %s1499 = scalar_lea.vmem %s438, 2
        %v1500 = vld [vmem:[%s1499] ss:$4 sm:$0xf]
        %v1502 = vlaneseq
        %v1503 = vshrl.u32 %v1502, 7
        %v1504 = vsub.s32 0, %v1503
        %v1505 = vrot.slane %v1500, %v1504
        %v1506 = vlaneseq
        %v1507 = vshrl.u32 %v1506, 7
        %v1508 = vsub.s32 1, %v1507
        %v1509 = vrot.slane %v1500, %v1508
        %v1510 = vlaneseq
        %v1511 = vshrl.u32 %v1510, 7
        %v1512 = vsub.s32 2, %v1511
        %v1513 = vrot.slane %v1500, %v1512
        %v1514 = vlaneseq
        %v1515 = vshrl.u32 %v1514, 7
        %v1516 = vsub.s32 3, %v1515
        %v1517 = vrot.slane %v1500, %v1516
        %v1522 = vmul.f32 %v1483, %v1505
        %v1523 = vmul.f32 %v1484, %v1509
        %v1524 = vmul.f32 %v1485, %v1513
        %v1525 = vmul.f32 %v1486, %v1517
        %v1526 = vmul.f32 %v1487, %v1505
        %v1527 = vmul.f32 %v1488, %v1509
        %v1528 = vmul.f32 %v1489, %v1513
        %v1529 = vmul.f32 %v1490, %v1517
        %v1530 = vmul.f32 %v1491, %v1505
        %v1531 = vmul.f32 %v1492, %v1509
        %v1532 = vmul.f32 %v1493, %v1513
        %v1533 = vmul.f32 %v1494, %v1517
        %v1534 = vmul.f32 %v1495, %v1505
        %v1535 = vmul.f32 %v1496, %v1509
        %v1536 = vmul.f32 %v1497, %v1513
        %v1537 = vmul.f32 %v1498, %v1517
        %v1538 = vmax.f32 %v1206, %v1522
        %v1539 = vmax.f32 %v1207, %v1523
        %v1540 = vmax.f32 %v1208, %v1524
        %v1541 = vmax.f32 %v1209, %v1525
        %v1542 = vmax.f32 %v1210, %v1526
        %v1543 = vmax.f32 %v1211, %v1527
        %v1544 = vmax.f32 %v1212, %v1528
        %v1545 = vmax.f32 %v1213, %v1529
        %v1546 = vmax.f32 %v1214, %v1530
        %v1547 = vmax.f32 %v1215, %v1531
        %v1548 = vmax.f32 %v1216, %v1532
        %v1549 = vmax.f32 %v1217, %v1533
        %v1550 = vmax.f32 %v1218, %v1534
        %v1551 = vmax.f32 %v1219, %v1535
        %v1552 = vmax.f32 %v1220, %v1536
        %v1553 = vmax.f32 %v1221, %v1537
        %v1554 = vpack.c.bf16 %v1542, %v1538
        %v1555 = vpack.c.bf16 %v1543, %v1539
        %v1556 = vpack.c.bf16 %v1544, %v1540
        %v1557 = vpack.c.bf16 %v1545, %v1541
        %v1558 = vpack.c.bf16 %v1550, %v1546
        %v1559 = vpack.c.bf16 %v1551, %v1547
        %v1560 = vpack.c.bf16 %v1552, %v1548
        %v1561 = vpack.c.bf16 %v1553, %v1549
        %1563 = vset.pattern.permute.xlu0 0
        %1564 = vperm.xlu0 %1563, %v478
        %v1565 = vpop.permute.xlu0 %1564
        %1568 = vset.pattern.permute.xlu0 0
        %1569 = vperm.xlu0 %1568, %v479
        %v1570 = vpop.permute.xlu0 %1569
        %1573 = vset.pattern.permute.xlu0 0
        %1574 = vperm.xlu0 %1573, %v480
        %v1575 = vpop.permute.xlu0 %1574
        %1578 = vset.pattern.permute.xlu0 0
        %1579 = vperm.xlu0 %1578, %v481
        %v1580 = vpop.permute.xlu0 %1579
        %v1586 = vunpack.c.l.b16 %v466
        %v1587 = vunpack.c.l.b16 %v467
        %v1588 = vunpack.c.l.b16 %v468
        %v1589 = vunpack.c.l.b16 %v469
        %v1590 = vpack.c.b16 %v1587, %v1586
        %v1591 = vpack.c.b16 %v1589, %v1588
        %v1593 = vsel %vm707, %v1590, 0
        %v1596 = vsel %vm707, %v1591, 0
        %1598 = vmatprep.subr.bf16.mxu0 0
        %1599 = vmatpush1.bf16.msra.mxu0 0
        %1600 = vmatprep.subr.bf16.mxu0 0
        %1601 = vmatpush1.bf16.msra.mxu0 0
        %1602 = vmatprep.subr.bf16.mxu0 0
        %1603 = vmatpush1.bf16.msra.mxu0 0
        %1604 = vmatprep.subr.bf16.mxu0 0
        %1605 = vmatpush1.bf16.msra.mxu0 0
        %1606 = vmatprep.subr.bf16.mxu0 0
        %1607 = vmatpush1.bf16.msra.mxu0 0
        %1608 = vmatprep.subr.bf16.mxu0 0
        %1609 = vmatpush1.bf16.msra.mxu0 0
        %1610 = vmatprep.subr.bf16.mxu0 %v1559
        %1611 = vmatpush1.bf16.msra.mxu0 %v1558
        %1612 = vmatprep.subr.bf16.mxu0 %v1555
        %1613 = vmatpush1.bf16.msra.mxu0 %v1554
        %1614 = vmatprep.subr.bf16.mxu0 0
        %1615 = vmatpush2.bf16.msra.mxu0 0
        %1616 = vmatprep.subr.bf16.mxu0 0
        %1617 = vmatpush2.bf16.msra.mxu0 0
        %1618 = vmatprep.subr.bf16.mxu0 0
        %1619 = vmatpush2.bf16.msra.mxu0 0
        %1620 = vmatprep.subr.bf16.mxu0 0
        %1621 = vmatpush2.bf16.msra.mxu0 0
        %1622 = vmatprep.subr.bf16.mxu0 0
        %1623 = vmatpush2.bf16.msra.mxu0 0
        %1624 = vmatprep.subr.bf16.mxu0 0
        %1625 = vmatpush2.bf16.msra.mxu0 0
        %1626 = vmatprep.subr.bf16.mxu0 0
        %1627 = vmatpush2.bf16.msra.mxu0 0
        %1628 = vmatprep.subr.bf16.mxu0 0
        %1629 = vmatpush2.bf16.msra.mxu0 0
        %1630 = vmatprep.mubr.bf16.mxu0 0
        %1631 = vmatmul.mubr.bf16.gmra.mxu0 %v1593
        %v1632 = vpop.f32.mrf.mxu0
        %v1633 = vadd.f32 %v1565, %v1632
        %v1634 = vpop.f32.mrf.mxu0
        %v1635 = vadd.f32 %v1565, %v1634
        %v1636 = vpop.f32.mrf.mxu0
        %v1637 = vadd.f32 %v1570, %v1636
        %v1638 = vpop.f32.mrf.mxu0
        %v1639 = vadd.f32 %v1570, %v1638
        %1640 = vmatprep.mubr.bf16.mxu0 0
        %1641 = vmatmul.mubr.bf16.gmra.mxu0 %v1596
        %v1642 = vpop.f32.mrf.mxu0
        %v1643 = vadd.f32 %v1575, %v1642
        %v1644 = vpop.f32.mrf.mxu0
        %v1645 = vadd.f32 %v1575, %v1644
        %v1646 = vpop.f32.mrf.mxu0
        %v1647 = vadd.f32 %v1580, %v1646
        %v1648 = vpop.f32.mrf.mxu0
        %v1649 = vadd.f32 %v1580, %v1648
        %1650 = vdwg.mxu0
        %1651 = vmatprep.subr.bf16.mxu0 0
        %1652 = vmatpush1.bf16.msra.mxu0 0
        %1653 = vmatprep.subr.bf16.mxu0 0
        %1654 = vmatpush1.bf16.msra.mxu0 0
        %1655 = vmatprep.subr.bf16.mxu0 0
        %1656 = vmatpush1.bf16.msra.mxu0 0
        %1657 = vmatprep.subr.bf16.mxu0 0
        %1658 = vmatpush1.bf16.msra.mxu0 0
        %1659 = vmatprep.subr.bf16.mxu0 0
        %1660 = vmatpush1.bf16.msra.mxu0 0
        %1661 = vmatprep.subr.bf16.mxu0 0
        %1662 = vmatpush1.bf16.msra.mxu0 0
        %1663 = vmatprep.subr.bf16.mxu0 %v1561
        %1664 = vmatpush1.bf16.msra.mxu0 %v1560
        %1665 = vmatprep.subr.bf16.mxu0 %v1557
        %1666 = vmatpush1.bf16.msra.mxu0 %v1556
        %1667 = vmatprep.subr.bf16.mxu0 0
        %1668 = vmatpush2.bf16.msra.mxu0 0
        %1669 = vmatprep.subr.bf16.mxu0 0
        %1670 = vmatpush2.bf16.msra.mxu0 0
        %1671 = vmatprep.subr.bf16.mxu0 0
        %1672 = vmatpush2.bf16.msra.mxu0 0
        %1673 = vmatprep.subr.bf16.mxu0 0
        %1674 = vmatpush2.bf16.msra.mxu0 0
        %1675 = vmatprep.subr.bf16.mxu0 0
        %1676 = vmatpush2.bf16.msra.mxu0 0
        %1677 = vmatprep.subr.bf16.mxu0 0
        %1678 = vmatpush2.bf16.msra.mxu0 0
        %1679 = vmatprep.subr.bf16.mxu0 0
        %1680 = vmatpush2.bf16.msra.mxu0 0
        %1681 = vmatprep.subr.bf16.mxu0 0
        %1682 = vmatpush2.bf16.msra.mxu0 0
        %1683 = vmatprep.mubr.bf16.mxu0 0
        %1684 = vmatmul.mubr.bf16.gmra.mxu0 %v1593
        %v1685 = vpop.f32.mrf.mxu0
        %v1686 = vadd.f32 %v1565, %v1685
        %v1687 = vpop.f32.mrf.mxu0
        %v1688 = vadd.f32 %v1565, %v1687
        %v1689 = vpop.f32.mrf.mxu0
        %v1690 = vadd.f32 %v1570, %v1689
        %v1691 = vpop.f32.mrf.mxu0
        %v1692 = vadd.f32 %v1570, %v1691
        %1693 = vmatprep.mubr.bf16.mxu0 0
        %1694 = vmatmul.mubr.bf16.gmra.mxu0 %v1596
        %v1695 = vpop.f32.mrf.mxu0
        %v1696 = vadd.f32 %v1575, %v1695
        %v1697 = vpop.f32.mrf.mxu0
        %v1698 = vadd.f32 %v1575, %v1697
        %v1699 = vpop.f32.mrf.mxu0
        %v1700 = vadd.f32 %v1580, %v1699
        %v1701 = vpop.f32.mrf.mxu0
        %v1702 = vadd.f32 %v1580, %v1701
        %1703 = vdwg.mxu0
        %v1704 = vmax.f32 %v1633, 0.0
        %v1705 = vmax.f32 %v1635, 0.0
        %v1706 = vmax.f32 %v1686, 0.0
        %v1707 = vmax.f32 %v1688, 0.0
        %v1708 = vmax.f32 %v1637, 0.0
        %v1709 = vmax.f32 %v1639, 0.0
        %v1710 = vmax.f32 %v1690, 0.0
        %v1711 = vmax.f32 %v1692, 0.0
        %v1712 = vmax.f32 %v1643, 0.0
        %v1713 = vmax.f32 %v1645, 0.0
        %v1714 = vmax.f32 %v1696, 0.0
        %v1715 = vmax.f32 %v1698, 0.0
        %v1716 = vmax.f32 %v1647, 0.0
        %v1717 = vmax.f32 %v1649, 0.0
        %v1718 = vmax.f32 %v1700, 0.0
        %v1719 = vmax.f32 %v1702, 0.0
        %v1720 = vld [vmem:[%s447] sm:$0xf]
        %vm1721 = vcmp.eq.s32.totalorder %v1720, 0
        %vm1722 = vcmp.eq.s32.totalorder %v1720, 1
        %v1723 = vsel %vm1721, 1, 0
        %v1724 = vsel %vm1722, 1, 0
        %v1725 = vlaneseq
        %v1726 = vshrl.u32 %v1725, 7
        %v1727 = vsub.s32 0, %v1726
        %v1728 = vrot.slane %v1723, %v1727
        %v1729 = vlaneseq
        %v1730 = vshrl.u32 %v1729, 7
        %v1731 = vsub.s32 1, %v1730
        %v1732 = vrot.slane %v1723, %v1731
        %v1733 = vlaneseq
        %v1734 = vshrl.u32 %v1733, 7
        %v1735 = vsub.s32 2, %v1734
        %v1736 = vrot.slane %v1723, %v1735
        %v1737 = vlaneseq
        %v1738 = vshrl.u32 %v1737, 7
        %v1739 = vsub.s32 3, %v1738
        %v1740 = vrot.slane %v1723, %v1739
        %v1741 = vlaneseq
        %v1742 = vshrl.u32 %v1741, 7
        %v1743 = vsub.s32 0, %v1742
        %v1744 = vrot.slane %v1724, %v1743
        %v1745 = vlaneseq
        %v1746 = vshrl.u32 %v1745, 7
        %v1747 = vsub.s32 1, %v1746
        %v1748 = vrot.slane %v1724, %v1747
        %v1749 = vlaneseq
        %v1750 = vshrl.u32 %v1749, 7
        %v1751 = vsub.s32 2, %v1750
        %v1752 = vrot.slane %v1724, %v1751
        %v1753 = vlaneseq
        %v1754 = vshrl.u32 %v1753, 7
        %v1755 = vsub.s32 3, %v1754
        %v1756 = vrot.slane %v1724, %v1755
        %vm1757 = vcmp.eq.s32.totalorder %v1728, 1
        %vm1758 = vcmp.eq.s32.totalorder %v1732, 1
        %vm1759 = vcmp.eq.s32.totalorder %v1736, 1
        %vm1760 = vcmp.eq.s32.totalorder %v1740, 1
        %vm1761 = vcmp.eq.s32.totalorder %v1744, 1
        %vm1762 = vcmp.eq.s32.totalorder %v1748, 1
        %vm1763 = vcmp.eq.s32.totalorder %v1752, 1
        %vm1764 = vcmp.eq.s32.totalorder %v1756, 1
        %v1765 = vsel %vm1757, %v1704, 0.0
        %v1766 = vsel %vm1758, %v1705, 0.0
        %v1767 = vsel %vm1759, %v1706, 0.0
        %v1768 = vsel %vm1760, %v1707, 0.0
        %v1769 = vsel %vm1757, %v1708, 0.0
        %v1770 = vsel %vm1758, %v1709, 0.0
        %v1771 = vsel %vm1759, %v1710, 0.0
        %v1772 = vsel %vm1760, %v1711, 0.0
        %v1773 = vsel %vm1757, %v1712, 0.0
        %v1774 = vsel %vm1758, %v1713, 0.0
        %v1775 = vsel %vm1759, %v1714, 0.0
        %v1776 = vsel %vm1760, %v1715, 0.0
        %v1777 = vsel %vm1757, %v1716, 0.0
        %v1778 = vsel %vm1758, %v1717, 0.0
        %v1779 = vsel %vm1759, %v1718, 0.0
        %v1780 = vsel %vm1760, %v1719, 0.0
        %v1781 = vsel %vm1761, %v1704, 0.0
        %v1782 = vsel %vm1762, %v1705, 0.0
        %v1783 = vsel %vm1763, %v1706, 0.0
        %v1784 = vsel %vm1764, %v1707, 0.0
        %v1785 = vsel %vm1761, %v1708, 0.0
        %v1786 = vsel %vm1762, %v1709, 0.0
        %v1787 = vsel %vm1763, %v1710, 0.0
        %v1788 = vsel %vm1764, %v1711, 0.0
        %v1789 = vsel %vm1761, %v1712, 0.0
        %v1790 = vsel %vm1762, %v1713, 0.0
        %v1791 = vsel %vm1763, %v1714, 0.0
        %v1792 = vsel %vm1764, %v1715, 0.0
        %v1793 = vsel %vm1761, %v1716, 0.0
        %v1794 = vsel %vm1762, %v1717, 0.0
        %v1795 = vsel %vm1763, %v1718, 0.0
        %v1796 = vsel %vm1764, %v1719, 0.0
        %v1797 = vld [vmem:[#allocation2] sm:$0x3]
        %v1798 = vmax.f32 %v1765, %v1766
        %v1799 = vmax.f32 %v1798, %v1767
        %v1800 = vmax.f32 %v1799, %v1768
        %1801 = vmax.xlane.f32.xlu0 %v1800
        %v1802 = vpop.xlane.xlu0 %1801
        %v1803 = vmax.f32 %v1769, %v1770
        %v1804 = vmax.f32 %v1803, %v1771
        %v1805 = vmax.f32 %v1804, %v1772
        %1806 = vmax.xlane.f32.xlu0 %v1805
        %v1807 = vpop.xlane.xlu0 %1806
        %v1808 = vmax.f32 %v1773, %v1774
        %v1809 = vmax.f32 %v1808, %v1775
        %v1810 = vmax.f32 %v1809, %v1776
        %1811 = vmax.xlane.f32.xlu0 %v1810
        %v1812 = vpop.xlane.xlu0 %1811
        %v1813 = vmax.f32 %v1777, %v1778
        %v1814 = vmax.f32 %v1813, %v1779
        %v1815 = vmax.f32 %v1814, %v1780
        %1816 = vmax.xlane.f32.xlu0 %v1815
        %v1817 = vpop.xlane.xlu0 %1816
        %v1818 = vmax.f32 %v1781, %v1782
        %v1819 = vmax.f32 %v1818, %v1783
        %v1820 = vmax.f32 %v1819, %v1784
        %1821 = vmax.xlane.f32.xlu0 %v1820
        %v1822 = vpop.xlane.xlu0 %1821
        %v1823 = vmax.f32 %v1785, %v1786
        %v1824 = vmax.f32 %v1823, %v1787
        %v1825 = vmax.f32 %v1824, %v1788
        %1826 = vmax.xlane.f32.xlu0 %v1825
        %v1827 = vpop.xlane.xlu0 %1826
        %v1828 = vmax.f32 %v1789, %v1790
        %v1829 = vmax.f32 %v1828, %v1791
        %v1830 = vmax.f32 %v1829, %v1792
        %1831 = vmax.xlane.f32.xlu0 %v1830
        %v1832 = vpop.xlane.xlu0 %1831
        %v1833 = vmax.f32 %v1793, %v1794
        %v1834 = vmax.f32 %v1833, %v1795
        %v1835 = vmax.f32 %v1834, %v1796
        %1836 = vmax.xlane.f32.xlu0 %v1835
        %v1837 = vpop.xlane.xlu0 %1836
        %v1846 = vlaneseq
        %v1847 = vand.u32 %v1846, 127
        %v1848 = vlaneseq
        %v1849 = vshrl.u32 %v1848, 7
        %v1850 = vsub.s32 %v1847, %v1849
        %v1851 = vrot.slane %v1802, %v1850
        %v1852 = vadd.s32 %v1847, 4294967288
        %v1853 = vlaneseq
        %v1854 = vshrl.u32 %v1853, 7
        %v1855 = vsub.s32 %v1852, %v1854
        %v1856 = vrot.slane %v1807, %v1855
        %vm1857 = vcmask 130112
        %v1858 = vsel %vm1857, %v1856, %v1851
        %v1859 = vadd.s32 %v1847, 4294967280
        %v1860 = vlaneseq
        %v1861 = vshrl.u32 %v1860, 7
        %v1862 = vsub.s32 %v1859, %v1861
        %v1863 = vrot.slane %v1812, %v1862
        %vm1864 = vcmask 195712
        %v1865 = vsel %vm1864, %v1863, %v1858
        %v1866 = vadd.s32 %v1847, 4294967272
        %v1867 = vlaneseq
        %v1868 = vshrl.u32 %v1867, 7
        %v1869 = vsub.s32 %v1866, %v1868
        %v1870 = vrot.slane %v1817, %v1869
        %vm1871 = vcmask 261312
        %v1872 = vsel %vm1871, %v1870, %v1865
        %v1873 = vlaneseq
        %v1874 = vshrl.u32 %v1873, 7
        %v1875 = vsub.s32 %v1847, %v1874
        %v1876 = vrot.slane %v1822, %v1875
        %v1877 = vlaneseq
        %v1878 = vshrl.u32 %v1877, 7
        %v1879 = vsub.s32 %v1852, %v1878
        %v1880 = vrot.slane %v1827, %v1879
        %v1881 = vsel %vm1857, %v1880, %v1876
        %v1882 = vlaneseq
        %v1883 = vshrl.u32 %v1882, 7
        %v1884 = vsub.s32 %v1859, %v1883
        %v1885 = vrot.slane %v1832, %v1884
        %v1886 = vsel %vm1864, %v1885, %v1881
        %v1887 = vlaneseq
        %v1888 = vshrl.u32 %v1887, 7
        %v1889 = vsub.s32 %v1866, %v1888
        %v1890 = vrot.slane %v1837, %v1889
        %v1891 = vsel %vm1871, %v1890, %v1886
        %vm1892 = vcmask 1041409
        %v1893 = vsel %vm1892, %v1891, %v1872
        %v1895 = vmax.f32 %v1797, %v1893
        %vm1896 = vcmask 254976
        %1897 = vst.msk [vmem:[#allocation2] sm:$0x3] %vm1896, %v1895
        %p1898 = scmp.eq.s32.totalorder %s28, 2
        // Predicated region
        $region84: #{tpu_custom_call.1} parent=74 // pred_check
          %p1899 = pneg %p1898
        $region85: #{tpu_custom_call.1} parent=74 // pred_check_branch
          %1901 = sbr.rel (%p1899) target = $region87
        $region86: #{tpu_custom_call.1} parent=74 // pred_region
          %v1902 = vld [vmem:[#allocation2] sm:$0x3]
          %1903 = vst.msk [vmem:[%s428] sm:$0x3] %vm1896, %v1902
        $region87: #{tpu_custom_call.1} parent=74 // pred_fallthru
          _
        %s1904 = sand.u32 %s259, 1
        %s1905 = scalar_lea.sflag [#allocation5], %s1904
        %s1906 = sand.u32 %s259, 1
        %s1907 = smul.addr %s1906, 2
        %s1908 = scalar_lea.vmem [#allocation4], %s1907
        // Predicated region
        $region88: #{tpu_custom_call.1} parent=74 // pred_check
          %p1909 = pneg %p269
        $region89: #{tpu_custom_call.1} parent=74 // pred_check_branch
          %1911 = sbr.rel (%p1909) target = $region91
        $region90: #{tpu_custom_call.1} parent=74 // pred_region
          %s1913 = ssub.s32 32, 32
          %1914 = vsyncadd %s1905, %s1913
          %s1915 = smul.addr %s27, 32
          %s1916 = scalar_lea.hbm %s9, %s1915
          %s1918 = sshll.u32 %s1908, 4
          %s1919 = int_to_ptr.vmem [resolvable:$true] %s1918
          %1921 = dma.vmem_to_hbm [thread:$0]  %s1919, 32, %s1916, %s1905
        $region91: #{tpu_custom_call.1} parent=74 // pred_fallthru
          _
      $region75: #{tpu_custom_call.1} parent=5 // pred_fallthru
        _
      %p1922 = scmp.le.s32.totalorder 2, %s18
      // Predicated region
      $region92: #{tpu_custom_call.1} parent=5 // pred_check
        %p1923 = pneg %p1922
      $region93: #{tpu_custom_call.1} parent=5 // pred_check_branch
        %1925 = sbr.rel (%p1923) target = $region95
      $region94: #{tpu_custom_call.1} parent=5 // pred_region
        %s1926 = ssub.s32 %s18, 2
        // Predicated region
        $region96: #{tpu_custom_call.1} parent=94 // pred_check
          %p1927 = pneg %p275
        $region97: #{tpu_custom_call.1} parent=94 // pred_check_branch
          %1929 = sbr.rel (%p1927) target = $region99
        $region98: #{tpu_custom_call.1} parent=94 // pred_region
          %s1930 = sand.u32 %s260, 1
          %s1931 = scalar_lea.sflag [#allocation5], %s1930
          %s1932 = sand.u32 %s260, 1
          %s1933 = smul.addr %s1932, 2
          %s1934 = scalar_lea.vmem [#allocation4], %s1933
          %1935 = dma.done %s1931, 32
        $region99: #{tpu_custom_call.1} parent=94 // pred_fallthru
          _
      $region95: #{tpu_custom_call.1} parent=5 // pred_fallthru
        _
    $region6: #{tpu_custom_call.1} parent=1 // loop_footer
      %s22 = sadd.s32 1, %s18
    $region7: #{tpu_custom_call.1} parent=1 // loop_footer_branch
      %17 = sbr.rel target = $region3
    $region8: #{tpu_custom_call.1} parent=1 // loop_exit
      _
    %1936 = vsyncpa [#allocation5], 1
    %s1937 = scalar_lea.sflag [#allocation5], 1
    %1938 = vsyncpa %s1937, 1

</llo_original>
